<compile_context>
chip_gen: v7x
topology: tpu7x:2x2x1
jax: 0.10.0
libtpu: 0.0.40
codegen_flags: <defaults>
</compile_context>

<pallas_src>
import functools
import math

import jax
import jax.numpy as jnp
from jax.experimental import pallas as pl
from jax.experimental.pallas import tpu as pltpu

MATMUL_DTYPE = jnp.bfloat16    # MXU operand dtype (weights + activations)
INTER_DTYPE = jnp.bfloat16     # dtype of the h1 / z intermediates in HBM
USE_TANH_GELU = False          # True: tanh-GELU rides the EUP slot (VALU
                               # relief on v6e/v7x); deviates ~1e-3 from exact.

_SQRT1_2 = 0.7071067811865476
_SQRT2_PI = 0.7978845608028654


# ---------------------------------------------------------------------------
# in-kernel math helpers (traced inside the Pallas kernels)
# ---------------------------------------------------------------------------
def _erf(x):
    # Abramowitz & Stegun 7.1.26 rational approximation, |err| ~ 1.5e-7.
    # TODO(synk): Mosaic has no direct erf lowering; exact-GELU is approximated.
    a1, a2, a3, a4, a5 = (0.254829592, -0.284496736, 1.421413741,
                          -1.453152027, 1.061405429)
    p = 0.3275911
    sgn = jnp.where(x < 0.0, -1.0, 1.0)
    ax = jnp.abs(x)
    t = 1.0 / (1.0 + p * ax)
    poly = ((((a5 * t + a4) * t + a3) * t + a2) * t + a1) * t
    return sgn * (1.0 - poly * jnp.exp(-ax * ax))


def _gelu(x):
    if USE_TANH_GELU:
        return 0.5 * x * (1.0 + jnp.tanh(_SQRT2_PI * (x + 0.044715 * x * x * x)))
    return 0.5 * x * (1.0 + _erf(x * _SQRT1_2))   # PyTorch nn.GELU() default


# ---------------------------------------------------------------------------
# Pallas kernels
# ---------------------------------------------------------------------------
def _conv1_kernel(x_ref, w_ref, b_ref, mask_ref, h1_ref, st_ref, *, TR):
    """conv1 (3 banded bf16 matmuls, f32 acc) + per-tile BN1 partial sums."""
    acc = jnp.zeros((TR, w_ref.shape[2]), jnp.float32)
    for kh in range(3):                               # row taps dh = kh - 1
        acc = acc + jnp.dot(x_ref[kh:kh + TR, :], w_ref[kh],
                            preferred_element_type=jnp.float32)
    h1 = acc + b_ref[...]
    h1_ref[...] = h1.astype(h1_ref.dtype)             # bf16 intermediate
    hm = h1 * mask_ref[...]                           # drop halo / pad-image rows
    st_ref[0:1, :] = jnp.sum(hm, axis=0, keepdims=True)
    st_ref[1:2, :] = jnp.sum(hm * h1, axis=0, keepdims=True)


def _conv2_kernel(h1_ref, x_ref, mask_ref, scale1_ref, shift1_ref,
                  w2_ref, wmid_ref, bias2_ref,
                  z_ref, st_ref, y1pad_ref, *, TR, PADR, IDENTITY_SKIP):
    """BN1-apply + GELU + conv2 (skip fused into the centre tap) + BN2 sums."""
    m = mask_ref[...]
    # BN1 as per-lane scale/shift; the mask zeroes per-image H-halo rows so
    # conv2 sees correct zero padding in H.
    y1 = _gelu(h1_ref[...].astype(jnp.float32) * scale1_ref[...]
               + shift1_ref[...]) * m
    y1c = y1.astype(wmid_ref.dtype)

    # Stage y1 into a row-padded f32 scratch for the +/-1 row taps.  Only the
    # two pad rows those taps actually read are zeroed each step (they only
    # influence discarded halo rows, but must be finite so NaNs from stale
    # VMEM cannot reach the masked statistics).
    lh = y1pad_ref.shape[1]
    y1pad_ref[PADR - 1:PADR, :] = jnp.zeros((1, lh), y1pad_ref.dtype)
    y1pad_ref[PADR + TR:PADR + TR + 1, :] = jnp.zeros((1, lh), y1pad_ref.dtype)
    y1pad_ref[PADR:PADR + TR, :] = y1

    xs = x_ref[1:1 + TR, :]                           # centre rows of x (bf16)
    if IDENTITY_SKIP:
        acc = jnp.dot(y1c, wmid_ref[...], preferred_element_type=jnp.float32)
        acc = acc + xs.astype(jnp.float32)            # x_skip = x (Cin == Cout)
    else:
        # 1x1 skip fused into the centre tap: K-concat [y1 ; x] vs [Wb2_c; Wsk]
        acc = jnp.dot(jnp.concatenate([y1c, xs], axis=1), wmid_ref[...],
                      preferred_element_type=jnp.float32)
    acc = acc + jnp.dot(
        y1pad_ref[PADR - 1:PADR - 1 + TR, :].astype(w2_ref.dtype), w2_ref[0],
        preferred_element_type=jnp.float32)
    acc = acc + jnp.dot(
        y1pad_ref[PADR + 1:PADR + 1 + TR, :].astype(w2_ref.dtype), w2_ref[1],
        preferred_element_type=jnp.float32)
    z = acc + bias2_ref[...]
    z_ref[...] = z.astype(z_ref.dtype)                # bf16 intermediate
    zm = z * m
    st_ref[0:1, :] = jnp.sum(zm, axis=0, keepdims=True)
    st_ref[1:2, :] = jnp.sum(zm * z, axis=0, keepdims=True)


def _bn2_gelu_kernel(z_ref, scale2_ref, shift2_ref, o_ref, *, H, HP, IPT):
    """BN2-apply + GELU; per-image H-halo rows dropped via the output block."""
    s = scale2_ref[...]
    t = shift2_ref[...]
    for j in range(IPT):
        z = z_ref[j * HP + 1:j * HP + 1 + H, :].astype(jnp.float32)
        o_ref[j * H:(j + 1) * H, :] = _gelu(z * s + t).astype(o_ref.dtype)


# ---------------------------------------------------------------------------
# wrapper helpers (layout / weight plumbing, plain XLA)
# ---------------------------------------------------------------------------
def _round_up(x, m):
    return ((x + m - 1) // m) * m


def _cdiv(a, b):
    return -(-a // b)


def _pad2(mat, rows, cols):
    return jnp.pad(mat, ((0, rows - mat.shape[0]), (0, cols - mat.shape[1])))


def _lane_row(vec, cp, W):
    # per-channel vector -> (1, W*cp) row replicated across the W lane blocks
    v = jnp.pad(vec, (0, cp - vec.shape[0]))
    return jnp.tile(v.reshape(1, cp), (W, 1)).reshape(1, W * cp)


def _banded_conv3x3(w_oihw, W, cpi, cpo):
    # torch conv weight (Cout, Cin, 3, 3) -> 3 banded (W*cpi, W*cpo) matrices,
    # one per kh; the kw taps / W zero padding are the band structure.
    mats = []
    for kh in range(3):
        acc = jnp.zeros((W * cpi, W * cpo), jnp.float32)
        for kw in range(3):
            dw = kw - 1
            blk = _pad2(jnp.transpose(w_oihw[:, :, kh, kw]), cpi, cpo)
            band = jnp.eye(W, k=-dw, dtype=jnp.float32)
            acc = acc + jnp.kron(band, blk)
        mats.append(acc)
    return jnp.stack(mats, axis=0)


def _blockdiag_1x1(w_oi, W, cpi, cpo):
    blk = _pad2(jnp.transpose(w_oi), cpi, cpo)
    return jnp.kron(jnp.eye(W, dtype=jnp.float32), blk)


def _bn_scale_shift(st, W, cp, gamma, beta, count, eps=1e-5):
    # combine per-tile (sum, sum-of-squares), reduce the W lane blocks,
    # training-mode (biased) batch statistics -> per-lane scale/shift rows.
    # TODO(synk): single-pass E[x^2]-mu^2 can cancel for large-mean
    # activations; switch to Welford-style tile merging if that regime matters.
    s = jnp.sum(st, axis=0)                       # (2, W*cp)
    s1 = s[0].reshape(W, cp).sum(axis=0)
    s2 = s[1].reshape(W, cp).sum(axis=0)
    mu = s1 / count
    var = jnp.maximum(s2 / count - mu * mu, 0.0)
    gp = jnp.pad(gamma, (0, cp - gamma.shape[0]))
    bp = jnp.pad(beta, (0, cp - beta.shape[0]))
    scale = gp * jax.lax.rsqrt(var + eps)
    shift = bp - mu * scale
    row = lambda v: jnp.tile(v.reshape(1, cp), (W, 1)).reshape(1, W * cp)
    return row(scale), row(shift)


def _vmem_limit_bytes():
    # ~96 MiB on v5e/v6e (128 MiB physical), ~48 MiB on v7x (64 MiB physical).
    try:
        cap = int(pltpu.get_tpu_info().vmem_capacity_bytes)
    except Exception:
        cap = 64 * 1024 * 1024
    return min(96 * 1024 * 1024, (cap * 3) // 4)


# ---------------------------------------------------------------------------
# main entry point
# ---------------------------------------------------------------------------
@jax.jit
def conv2d_res_block(x_nchw, params):
    (w1, b1, g1, be1, w2, b2, g2, be2, wsk, bsk) = params
    N, Cin, H, W = x_nchw.shape
    Chid, Cout = w1.shape[0], w2.shape[0]
    Hp = H + 2                                    # per-image H zero-halo rows
    identity_skip = wsk is None

    # pad channels so W*C is a multiple of 128 (lane-dense layout)
    g = 128 // math.gcd(W, 128)
    cpi, cph, cpo = _round_up(Cin, g), _round_up(Chid, g), _round_up(Cout, g)
    Lin, Lh, Lo = W * cpi, W * cph, W * cpo

    # --- tiling: whole images per tile (halo-free tile boundaries); aim for
    # ~512-row tiles but never fewer than 2 tiles when N >= 2 (pipelining and
    # v7x 2-TC sharding); non-dividing N is zero-padded and masked out.
    rows_target = 512
    ipt = max(1, min(max(1, rows_target // Hp), max(1, (N + 1) // 2)))
    num_tiles = _cdiv(N, ipt)
    ipt = _cdiv(N, num_tiles)                     # rebalance to minimise padding
    num_tiles = _cdiv(N, ipt)
    N_pad = num_tiles * ipt
    TR = ipt * Hp                                 # rows per tile
    TP = TR + 2                                   # +1 tile pad row each side
    PADR = 8                                      # aligned pad rows of scratch

    # ---- weights / biases -> lane-dense banded form (bf16 MXU operands) ----
    Wb1 = _banded_conv3x3(w1, W, cpi, cph).astype(MATMUL_DTYPE)
    Wb2 = _banded_conv3x3(w2, W, cph, cpo)
    W2taps = jnp.stack([Wb2[0], Wb2[2]], axis=0).astype(MATMUL_DTYPE)
    if identity_skip:
        Wmid = Wb2[1].astype(MATMUL_DTYPE)
        bias2 = _lane_row(b2, cpo, W)
    else:
        Wmid = jnp.concatenate(
            [Wb2[1], _blockdiag_1x1(wsk, W, cpi, cpo)],
            axis=0).astype(MATMUL_DTYPE)
        bias2 = _lane_row(b2, cpo, W)
        if bsk is not None:
            bias2 = bias2 + _lane_row(bsk, cpo, W)
    b1_row = _lane_row(b1, cph, W)

    # ---- input layout: NCHW -> (tiles, TR+2, W*cpi), bf16 -------------------
    x_nhwc = jnp.transpose(x_nchw, (0, 2, 3, 1)).astype(jnp.float32)
    x_p = jnp.pad(x_nhwc, ((0, N_pad - N), (1, 1), (0, 0), (0, cpi - Cin)))
    x_rows = x_p.reshape(N_pad * Hp, Lin)
    x_tiles = jnp.pad(x_rows.reshape(num_tiles, TR, Lin),
                      ((0, 0), (1, 1), (0, 0))).astype(MATMUL_DTYPE)

    # per-tile row mask: 1.0 on real image rows, 0.0 on halo / pad-image rows
    ridx = jnp.arange(N_pad * Hp, dtype=jnp.int32)
    rim, img = ridx % Hp, ridx // Hp
    mask = (((rim >= 1) & (rim <= H) & (img < N))
            .astype(jnp.float32).reshape(num_tiles, TR, 1))

    cparams = pltpu.CompilerParams(
        dimension_semantics=("parallel",),        # megacore / v7x 2-TC friendly
        vmem_limit_bytes=_vmem_limit_bytes())
    whole = pl.BlockSpec(memory_space=pltpu.MemorySpace.VMEM)
    xin_block = pl.BlockSpec((None, TP, Lin), lambda i: (i, 0, 0))
    mask_block = pl.BlockSpec((None, TR, 1), lambda i: (i, 0, 0))
    row_block = lambda L: pl.BlockSpec((None, TR, L), lambda i: (i, 0, 0))
    st_block = lambda L: pl.BlockSpec((None, 2, L), lambda i: (i, 0, 0))
    count = float(N * H * W)

    # ---- pass 1: conv1 + BN1 partial stats ----------------------------------
    h1_tiles, st1 = pl.pallas_call(
        functools.partial(_conv1_kernel, TR=TR),
        grid=(num_tiles,),
        in_specs=[xin_block, whole, whole, mask_block],
        out_specs=(row_block(Lh), st_block(Lh)),
        out_shape=(jax.ShapeDtypeStruct((num_tiles, TR, Lh), INTER_DTYPE),
                   jax.ShapeDtypeStruct((num_tiles, 2, Lh), jnp.float32)),
        compiler_params=cparams,
    )(x_tiles, Wb1, b1_row, mask)

    scale1, shift1 = _bn_scale_shift(st1, W, cph, g1, be1, count)

    # ---- pass 2: BN1+GELU, conv2 (+fused skip), BN2 partial stats ------------
    z_tiles, st2 = pl.pallas_call(
        functools.partial(_conv2_kernel, TR=TR, PADR=PADR,
                          IDENTITY_SKIP=identity_skip),
        grid=(num_tiles,),
        in_specs=[row_block(Lh), xin_block, mask_block, whole, whole,
                  whole, whole, whole],
        out_specs=(row_block(Lo), st_block(Lo)),
        out_shape=(jax.ShapeDtypeStruct((num_tiles, TR, Lo), INTER_DTYPE),
                   jax.ShapeDtypeStruct((num_tiles, 2, Lo), jnp.float32)),
        scratch_shapes=[pltpu.VMEM((TR + 2 * PADR, Lh), jnp.float32)],
        compiler_params=cparams,
    )(h1_tiles, x_tiles, mask, scale1, shift1, W2taps, Wmid, bias2)

    scale2, shift2 = _bn_scale_shift(st2, W, cpo, g2, be2, count)

    # ---- pass 3: BN2 + GELU; halo rows dropped via the output BlockSpec ------
    out_tiles = pl.pallas_call(
        functools.partial(_bn2_gelu_kernel, H=H, HP=Hp, IPT=ipt),
        grid=(num_tiles,),
        in_specs=[row_block(Lo), whole, whole],
        out_specs=pl.BlockSpec((None, ipt * H, Lo), lambda i: (i, 0, 0)),
        out_shape=jax.ShapeDtypeStruct((num_tiles, ipt * H, Lo), jnp.float32),
        compiler_params=cparams,
    )(z_tiles, scale2, shift2)

    # drop image / channel padding, back to NCHW
    out = out_tiles.reshape(N_pad, H, W, cpo)[:N, :, :, :Cout]
    # TODO(synk): keep NHWC here if the downstream consumer accepts it -- the
    # final transpose is an extra full HBM round-trip of the output tensor.
    return jnp.transpose(out, (0, 3, 1, 2))


# ---------------------------------------------------------------------------
# parameters (PyTorch-layout, default-initialized BatchNorm affine)
# ---------------------------------------------------------------------------
def init_params(key, cin, chid, cout):
    ks = jax.random.split(key, 6)
    w1 = 0.1 * jax.random.normal(ks[0], (chid, cin, 3, 3), jnp.float32)
    b1 = 0.1 * jax.random.normal(ks[1], (chid,), jnp.float32)
    g1 = jnp.ones((chid,), jnp.float32)
    be1 = jnp.zeros((chid,), jnp.float32)
    w2 = 0.1 * jax.random.normal(ks[2], (cout, chid, 3, 3), jnp.float32)
    b2 = 0.1 * jax.random.normal(ks[3], (cout,), jnp.float32)
    g2 = jnp.ones((cout,), jnp.float32)
    be2 = jnp.zeros((cout,), jnp.float32)
    if cin != cout:
        wsk = 0.1 * jax.random.normal(ks[4], (cout, cin), jnp.float32)
        bsk = 0.1 * jax.random.normal(ks[5], (cout,), jnp.float32)
    else:
        wsk, bsk = None, None
    return (w1, b1, g1, be1, w2, b2, g2, be2, wsk, bsk)


def reference_forward(x, params):
    """Pure-JAX reference matching the PyTorch module (training-mode BN)."""
    (w1, b1, g1, be1, w2, b2, g2, be2, wsk, bsk) = params

    def conv3x3(v, w, b):
        y = jax.lax.conv_general_dilated(
            v, w, window_strides=(1, 1), padding=((1, 1), (1, 1)),
            dimension_numbers=("NCHW", "OIHW", "NCHW"))
        return y + b[None, :, None, None]

    def bn(v, gamma, beta, eps=1e-5):
        mu = v.mean(axis=(0, 2, 3), keepdims=True)
        var = v.var(axis=(0, 2, 3), keepdims=True)     # biased, as PyTorch BN
        vn = (v - mu) * jax.lax.rsqrt(var + eps)
        return vn * gamma[None, :, None, None] + beta[None, :, None, None]

    gelu = lambda v: jax.nn.gelu(v, approximate=False)
    y1 = gelu(bn(conv3x3(x, w1, b1), g1, be1))
    h2 = conv3x3(y1, w2, b2)
    if wsk is not None:
        skip = jnp.einsum("oc,nchw->nohw", wsk, x) + bsk[None, :, None, None]
    else:
        skip = x
    return gelu(bn(h2 + skip, g2, be2))


if __name__ == "__main__":
    key = jax.random.PRNGKey(0)
    kx, kp = jax.random.split(key)

    N, Cin, H, W = 2, 4, 16, 16      # small NCHW input, like the PyTorch module
    Chid, Cout = 8, 6                # in_channels != out_channels -> 1x1 skip

    x = jax.random.normal(kx, (N, Cin, H, W), jnp.float32)
    params = init_params(kp, Cin, Chid, Cout)

    out = conv2d_res_block(x, params)
    jax.block_until_ready(out)
    assert out.shape == (N, Cout, H, W) and out.dtype == jnp.float32

    # loose tolerance: bf16 MXU operands + bf16 inter-pass intermediates
    ref = reference_forward(x, params)
    err = float(jnp.max(jnp.abs(out - ref)))
    assert err < 0.15, f"max abs error vs reference too large: {err}"
    print("KERNEL_OK")
</pallas_src>

<mosaic_0001>
module attributes {stable_mosaic.version = 11 : i64} {
  func.func @_conv1_kernel(%arg0: i32, %arg1: memref<1x20x128xbf16, #tpu.memory_space<vmem>>, %arg2: memref<3x128x128xbf16, #tpu.memory_space<vmem>>, %arg3: memref<1x128xf32, #tpu.memory_space<vmem>>, %arg4: memref<1x18x1xf32, #tpu.memory_space<vmem>>, %arg5: memref<1x18x128xbf16, #tpu.memory_space<vmem>>, %arg6: memref<1x2x128xf32, #tpu.memory_space<vmem>>) attributes {dimension_semantics = [#tpu.dimension_semantics<parallel>], iteration_bounds = array<i64: 2>, scalar_prefetch = 0 : i64, scratch_operands = 0 : i64, tpu.core_type = #tpu.core_type<tc>, window_params = [{transform_indices = @transform_0, window_bounds = array<i64: 1, 20, 128>}, {pipeline_mode = #tpu.pipeline_mode<synchronous>, transform_indices = @transform_1, window_bounds = array<i64: 3, 128, 128>}, {pipeline_mode = #tpu.pipeline_mode<synchronous>, transform_indices = @transform_2, window_bounds = array<i64: 1, 128>}, {transform_indices = @transform_3, window_bounds = array<i64: 1, 18, 1>}, {transform_indices = @transform_4, window_bounds = array<i64: 1, 18, 128>}, {transform_indices = @transform_5, window_bounds = array<i64: 1, 2, 128>}]} {
    %cst = arith.constant 0.000000e+00 : f32
    %0 = vector.broadcast %cst : f32 to vector<18x128xf32>
    %c0 = arith.constant 0 : index
    %c0_0 = arith.constant 0 : index
    %c0_1 = arith.constant 0 : index
    %1 = vector.load %arg1[%c0, %c0_0, %c0_1] : memref<1x20x128xbf16, #tpu.memory_space<vmem>>, vector<1x18x128xbf16>
    %2 = vector.shape_cast %1 : vector<1x18x128xbf16> to vector<18x128xbf16>
    %c0_2 = arith.constant 0 : index
    %c0_3 = arith.constant 0 : index
    %c0_4 = arith.constant 0 : index
    %3 = vector.load %arg2[%c0_2, %c0_3, %c0_4] : memref<3x128x128xbf16, #tpu.memory_space<vmem>>, vector<1x128x128xbf16>
    %4 = vector.shape_cast %3 : vector<1x128x128xbf16> to vector<128x128xbf16>
    %cst_5 = arith.constant dense<0.000000e+00> : vector<18x128xf32>
    %5 = tpu.matmul %2, %4, %cst_5 {dimension_numbers = #tpu.dot_dimension_numbers<[1], [0], [0], [1], [0, 0, 1, 1], [], []>} : vector<18x128xbf16>, vector<128x128xbf16>, vector<18x128xf32> -> vector<18x128xf32>
    %6 = arith.addf %0, %5 : vector<18x128xf32>
    %c0_6 = arith.constant 0 : index
    %c1 = arith.constant 1 : index
    %c0_7 = arith.constant 0 : index
    %7 = vector.load %arg1[%c0_6, %c1, %c0_7] : memref<1x20x128xbf16, #tpu.memory_space<vmem>>, vector<1x18x128xbf16>
    %8 = vector.shape_cast %7 : vector<1x18x128xbf16> to vector<18x128xbf16>
    %c1_8 = arith.constant 1 : index
    %c0_9 = arith.constant 0 : index
    %c0_10 = arith.constant 0 : index
    %9 = vector.load %arg2[%c1_8, %c0_9, %c0_10] : memref<3x128x128xbf16, #tpu.memory_space<vmem>>, vector<1x128x128xbf16>
    %10 = vector.shape_cast %9 : vector<1x128x128xbf16> to vector<128x128xbf16>
    %cst_11 = arith.constant dense<0.000000e+00> : vector<18x128xf32>
    %11 = tpu.matmul %8, %10, %cst_11 {dimension_numbers = #tpu.dot_dimension_numbers<[1], [0], [0], [1], [0, 0, 1, 1], [], []>} : vector<18x128xbf16>, vector<128x128xbf16>, vector<18x128xf32> -> vector<18x128xf32>
    %12 = arith.addf %6, %11 : vector<18x128xf32>
    %c0_12 = arith.constant 0 : index
    %c2 = arith.constant 2 : index
    %c0_13 = arith.constant 0 : index
    %13 = vector.load %arg1[%c0_12, %c2, %c0_13] : memref<1x20x128xbf16, #tpu.memory_space<vmem>>, vector<1x18x128xbf16>
    %14 = vector.shape_cast %13 : vector<1x18x128xbf16> to vector<18x128xbf16>
    %c2_14 = arith.constant 2 : index
    %c0_15 = arith.constant 0 : index
    %c0_16 = arith.constant 0 : index
    %15 = vector.load %arg2[%c2_14, %c0_15, %c0_16] : memref<3x128x128xbf16, #tpu.memory_space<vmem>>, vector<1x128x128xbf16>
    %16 = vector.shape_cast %15 : vector<1x128x128xbf16> to vector<128x128xbf16>
    %cst_17 = arith.constant dense<0.000000e+00> : vector<18x128xf32>
    %17 = tpu.matmul %14, %16, %cst_17 {dimension_numbers = #tpu.dot_dimension_numbers<[1], [0], [0], [1], [0, 0, 1, 1], [], []>} : vector<18x128xbf16>, vector<128x128xbf16>, vector<18x128xf32> -> vector<18x128xf32>
    %18 = arith.addf %12, %17 : vector<18x128xf32>
    %c0_18 = arith.constant 0 : index
    %c0_19 = arith.constant 0 : index
    %19 = vector.load %arg3[%c0_18, %c0_19] : memref<1x128xf32, #tpu.memory_space<vmem>>, vector<1x128xf32>
    %20 = vector.broadcast %19 : vector<1x128xf32> to vector<18x128xf32>
    %21 = arith.addf %18, %20 : vector<18x128xf32>
    %22 = arith.truncf %21 : vector<18x128xf32> to vector<18x128xbf16>
    %c0_20 = arith.constant 0 : index
    %c0_21 = arith.constant 0 : index
    %c0_22 = arith.constant 0 : index
    %23 = vector.load %arg5[%c0_20, %c0_21, %c0_22] : memref<1x18x128xbf16, #tpu.memory_space<vmem>>, vector<1x18x128xbf16>
    %24 = vector.shape_cast %23 : vector<1x18x128xbf16> to vector<18x128xbf16>
    %25 = vector.shape_cast %22 : vector<18x128xbf16> to vector<1x18x128xbf16>
    tpu.vector_store %arg5[%c0_20, %c0_21, %c0_22], %25 {strides = array<i32>} : memref<1x18x128xbf16, #tpu.memory_space<vmem>>, vector<1x18x128xbf16>,
    %c0_23 = arith.constant 0 : index
    %c0_24 = arith.constant 0 : index
    %c0_25 = arith.constant 0 : index
    %26 = vector.load %arg4[%c0_23, %c0_24, %c0_25] : memref<1x18x1xf32, #tpu.memory_space<vmem>>, vector<1x18x1xf32>
    %27 = vector.shape_cast %26 : vector<1x18x1xf32> to vector<18x1xf32>
    %28 = vector.broadcast %27 : vector<18x1xf32> to vector<18x128xf32>
    %29 = arith.mulf %21, %28 : vector<18x128xf32>
    %cst_26 = arith.constant dense<0.000000e+00> : vector<128xf32>
    %30 = vector.multi_reduction <add>, %29, %cst_26 [0] : vector<18x128xf32> to vector<128xf32>
    %31 = vector.shape_cast %30 : vector<128xf32> to vector<1x128xf32>
    %c0_27 = arith.constant 0 : index
    %c0_28 = arith.constant 0 : index
    %c0_29 = arith.constant 0 : index
    %32 = vector.load %arg6[%c0_27, %c0_28, %c0_29] : memref<1x2x128xf32, #tpu.memory_space<vmem>>, vector<1x1x128xf32>
    %33 = vector.shape_cast %32 : vector<1x1x128xf32> to vector<1x128xf32>
    %34 = vector.shape_cast %31 : vector<1x128xf32> to vector<1x1x128xf32>
    tpu.vector_store %arg6[%c0_27, %c0_28, %c0_29], %34 {strides = array<i32>} : memref<1x2x128xf32, #tpu.memory_space<vmem>>, vector<1x1x128xf32>,
    %35 = arith.mulf %29, %21 : vector<18x128xf32>
    %cst_30 = arith.constant dense<0.000000e+00> : vector<128xf32>
    %36 = vector.multi_reduction <add>, %35, %cst_30 [0] : vector<18x128xf32> to vector<128xf32>
    %37 = vector.shape_cast %36 : vector<128xf32> to vector<1x128xf32>
    %c0_31 = arith.constant 0 : index
    %c1_32 = arith.constant 1 : index
    %c0_33 = arith.constant 0 : index
    %38 = vector.load %arg6[%c0_31, %c1_32, %c0_33] : memref<1x2x128xf32, #tpu.memory_space<vmem>>, vector<1x1x128xf32>
    %39 = vector.shape_cast %38 : vector<1x1x128xf32> to vector<1x128xf32>
    %40 = vector.shape_cast %37 : vector<1x128xf32> to vector<1x1x128xf32>
    tpu.vector_store %arg6[%c0_31, %c1_32, %c0_33], %40 {strides = array<i32>} : memref<1x2x128xf32, #tpu.memory_space<vmem>>, vector<1x1x128xf32>,
    return
  }
  func.func @transform_0(%arg0: i32) -> (i32, i32, i32) {
    %c0_i32 = arith.constant 0 : i32
    %c0_i32_0 = arith.constant 0 : i32
    %c0_i32_1 = arith.constant 0 : i32
    return %arg0, %c0_i32, %c0_i32_0 : i32, i32, i32
  }
  func.func @transform_1(%arg0: i32) -> (i32, i32, i32) {
    %c0_i32 = arith.constant 0 : i32
    %c0_i32_0 = arith.constant 0 : i32
    %c0_i32_1 = arith.constant 0 : i32
    %c0_i32_2 = arith.constant 0 : i32
    return %c0_i32, %c0_i32_0, %c0_i32_1 : i32, i32, i32
  }
  func.func @transform_2(%arg0: i32) -> (i32, i32) {
    %c0_i32 = arith.constant 0 : i32
    %c0_i32_0 = arith.constant 0 : i32
    %c0_i32_1 = arith.constant 0 : i32
    return %c0_i32, %c0_i32_0 : i32, i32
  }
  func.func @transform_3(%arg0: i32) -> (i32, i32, i32) {
    %c0_i32 = arith.constant 0 : i32
    %c0_i32_0 = arith.constant 0 : i32
    %c0_i32_1 = arith.constant 0 : i32
    return %arg0, %c0_i32, %c0_i32_0 : i32, i32, i32
  }
  func.func @transform_4(%arg0: i32) -> (i32, i32, i32) {
    %c0_i32 = arith.constant 0 : i32
    %c0_i32_0 = arith.constant 0 : i32
    %c0_i32_1 = arith.constant 0 : i32
    return %arg0, %c0_i32, %c0_i32_0 : i32, i32, i32
  }
  func.func @transform_5(%arg0: i32) -> (i32, i32, i32) {
    %c0_i32 = arith.constant 0 : i32
    %c0_i32_0 = arith.constant 0 : i32
    %c0_i32_1 = arith.constant 0 : i32
    return %arg0, %c0_i32, %c0_i32_0 : i32, i32, i32
  }
}

module attributes {stable_mosaic.version = 11 : i64} {
  func.func @_conv2_kernel(%arg0: i32, %arg1: memref<1x18x128xbf16, #tpu.memory_space<vmem>>, %arg2: memref<1x20x128xbf16, #tpu.memory_space<vmem>>, %arg3: memref<1x18x1xf32, #tpu.memory_space<vmem>>, %arg4: memref<1x128xf32, #tpu.memory_space<vmem>>, %arg5: memref<1x128xf32, #tpu.memory_space<vmem>>, %arg6: memref<2x128x128xbf16, #tpu.memory_space<vmem>>, %arg7: memref<256x128xbf16, #tpu.memory_space<vmem>>, %arg8: memref<1x128xf32, #tpu.memory_space<vmem>>, %arg9: memref<1x18x128xbf16, #tpu.memory_space<vmem>>, %arg10: memref<1x2x128xf32, #tpu.memory_space<vmem>>, %arg11: memref<34x128xf32, #tpu.memory_space<vmem>>) attributes {dimension_semantics = [#tpu.dimension_semantics<parallel>], iteration_bounds = array<i64: 2>, scalar_prefetch = 0 : i64, scratch_operands = 1 : i64, tpu.core_type = #tpu.core_type<tc>, window_params = [{transform_indices = @transform_0, window_bounds = array<i64: 1, 18, 128>}, {transform_indices = @transform_1, window_bounds = array<i64: 1, 20, 128>}, {transform_indices = @transform_2, window_bounds = array<i64: 1, 18, 1>}, {pipeline_mode = #tpu.pipeline_mode<synchronous>, transform_indices = @transform_3, window_bounds = array<i64: 1, 128>}, {pipeline_mode = #tpu.pipeline_mode<synchronous>, transform_indices = @transform_4, window_bounds = array<i64: 1, 128>}, {pipeline_mode = #tpu.pipeline_mode<synchronous>, transform_indices = @transform_5, window_bounds = array<i64: 2, 128, 128>}, {pipeline_mode = #tpu.pipeline_mode<synchronous>, transform_indices = @transform_6, window_bounds = array<i64: 256, 128>}, {pipeline_mode = #tpu.pipeline_mode<synchronous>, transform_indices = @transform_7, window_bounds = array<i64: 1, 128>}, {transform_indices = @transform_8, window_bounds = array<i64: 1, 18, 128>}, {transform_indices = @transform_9, window_bounds = array<i64: 1, 2, 128>}]} {
    %c0 = arith.constant 0 : index
    %c0_0 = arith.constant 0 : index
    %c0_1 = arith.constant 0 : index
    %0 = vector.load %arg3[%c0, %c0_0, %c0_1] : memref<1x18x1xf32, #tpu.memory_space<vmem>>, vector<1x18x1xf32>
    %1 = vector.shape_cast %0 : vector<1x18x1xf32> to vector<18x1xf32>
    %c0_2 = arith.constant 0 : index
    %c0_3 = arith.constant 0 : index
    %c0_4 = arith.constant 0 : index
    %2 = vector.load %arg1[%c0_2, %c0_3, %c0_4] : memref<1x18x128xbf16, #tpu.memory_space<vmem>>, vector<1x18x128xbf16>
    %3 = vector.shape_cast %2 : vector<1x18x128xbf16> to vector<18x128xbf16>
    %4 = arith.extf %3 : vector<18x128xbf16> to vector<18x128xf32>
    %c0_5 = arith.constant 0 : index
    %c0_6 = arith.constant 0 : index
    %5 = vector.load %arg4[%c0_5, %c0_6] : memref<1x128xf32, #tpu.memory_space<vmem>>, vector<1x128xf32>
    %6 = vector.broadcast %5 : vector<1x128xf32> to vector<18x128xf32>
    %7 = arith.mulf %4, %6 : vector<18x128xf32>
    %c0_7 = arith.constant 0 : index
    %c0_8 = arith.constant 0 : index
    %8 = vector.load %arg5[%c0_7, %c0_8] : memref<1x128xf32, #tpu.memory_space<vmem>>, vector<1x128xf32>
    %9 = vector.broadcast %8 : vector<1x128xf32> to vector<18x128xf32>
    %10 = arith.addf %7, %9 : vector<18x128xf32>
    %cst = arith.constant 5.000000e-01 : f32
    %11 = vector.broadcast %cst : f32 to vector<18x128xf32>
    %12 = arith.mulf %11, %10 : vector<18x128xf32>
    %cst_9 = arith.constant 0.707106769 : f32
    %13 = vector.broadcast %cst_9 : f32 to vector<18x128xf32>
    %14 = arith.mulf %10, %13 : vector<18x128xf32>
    %cst_10 = arith.constant 0.000000e+00 : f32
    %15 = vector.broadcast %cst_10 : f32 to vector<18x128xf32>
    %16 = arith.cmpf olt, %14, %15 : vector<18x128xf32>
    %cst_11 = arith.constant -1.000000e+00 : f32
    %cst_12 = arith.constant 1.000000e+00 : f32
    %17 = vector.broadcast %cst_11 : f32 to vector<18x128xf32>
    %18 = vector.broadcast %cst_12 : f32 to vector<18x128xf32>
    %19 = arith.select %16, %17, %18 : vector<18x128xi1>, vector<18x128xf32>
    %20 = math.absf %14 : vector<18x128xf32>
    %cst_13 = arith.constant 0.327591091 : f32
    %21 = vector.broadcast %cst_13 : f32 to vector<18x128xf32>
    %22 = arith.mulf %21, %20 : vector<18x128xf32>
    %cst_14 = arith.constant 1.000000e+00 : f32
    %23 = vector.broadcast %cst_14 : f32 to vector<18x128xf32>
    %24 = arith.addf %23, %22 : vector<18x128xf32>
    %cst_15 = arith.constant 1.000000e+00 : f32
    %25 = vector.broadcast %cst_15 : f32 to vector<18x128xf32>
    %26 = arith.divf %25, %24 : vector<18x128xf32>
    %cst_16 = arith.constant 1.06140542 : f32
    %27 = vector.broadcast %cst_16 : f32 to vector<18x128xf32>
    %28 = arith.mulf %27, %26 : vector<18x128xf32>
    %cst_17 = arith.constant -1.45315206 : f32
    %29 = vector.broadcast %cst_17 : f32 to vector<18x128xf32>
    %30 = arith.addf %28, %29 : vector<18x128xf32>
    %31 = arith.mulf %30, %26 : vector<18x128xf32>
    %cst_18 = arith.constant 1.42141378 : f32
    %32 = vector.broadcast %cst_18 : f32 to vector<18x128xf32>
    %33 = arith.addf %31, %32 : vector<18x128xf32>
    %34 = arith.mulf %33, %26 : vector<18x128xf32>
    %cst_19 = arith.constant -0.284496725 : f32
    %35 = vector.broadcast %cst_19 : f32 to vector<18x128xf32>
    %36 = arith.addf %34, %35 : vector<18x128xf32>
    %37 = arith.mulf %36, %26 : vector<18x128xf32>
    %cst_20 = arith.constant 0.254829586 : f32
    %38 = vector.broadcast %cst_20 : f32 to vector<18x128xf32>
    %39 = arith.addf %37, %38 : vector<18x128xf32>
    %40 = arith.mulf %39, %26 : vector<18x128xf32>
    %cst_21 = arith.constant 0.000000e+00 : f32
    %41 = vector.broadcast %cst_21 : f32 to vector<18x128xf32>
    %42 = arith.subf %41, %20 : vector<18x128xf32>
    %43 = arith.mulf %42, %20 : vector<18x128xf32>
    %44 = math.exp %43 : vector<18x128xf32>
    %45 = arith.mulf %40, %44 : vector<18x128xf32>
    %cst_22 = arith.constant 1.000000e+00 : f32
    %46 = vector.broadcast %cst_22 : f32 to vector<18x128xf32>
    %47 = arith.subf %46, %45 : vector<18x128xf32>
    %48 = arith.mulf %19, %47 : vector<18x128xf32>
    %cst_23 = arith.constant 1.000000e+00 : f32
    %49 = vector.broadcast %cst_23 : f32 to vector<18x128xf32>
    %50 = arith.addf %49, %48 : vector<18x128xf32>
    %51 = arith.mulf %12, %50 : vector<18x128xf32>
    %52 = vector.broadcast %1 : vector<18x1xf32> to vector<18x128xf32>
    %53 = arith.mulf %51, %52 : vector<18x128xf32>
    %54 = arith.truncf %53 : vector<18x128xf32> to vector<18x128xbf16>
    %cst_24 = arith.constant 0.000000e+00 : f32
    %55 = vector.broadcast %cst_24 : f32 to vector<1x128xf32>
    %c7 = arith.constant 7 : index
    %c0_25 = arith.constant 0 : index
    %56 = vector.load %arg11[%c7, %c0_25] : memref<34x128xf32, #tpu.memory_space<vmem>>, vector<1x128xf32>
    tpu.vector_store %arg11[%c7, %c0_25], %55 {strides = array<i32>} : memref<34x128xf32, #tpu.memory_space<vmem>>, vector<1x128xf32>,
    %cst_26 = arith.constant 0.000000e+00 : f32
    %57 = vector.broadcast %cst_26 : f32 to vector<1x128xf32>
    %c26 = arith.constant 26 : index
    %c0_27 = arith.constant 0 : index
    %58 = vector.load %arg11[%c26, %c0_27] : memref<34x128xf32, #tpu.memory_space<vmem>>, vector<1x128xf32>
    tpu.vector_store %arg11[%c26, %c0_27], %57 {strides = array<i32>} : memref<34x128xf32, #tpu.memory_space<vmem>>, vector<1x128xf32>,
    %c8 = arith.constant 8 : index
    %c0_28 = arith.constant 0 : index
    %59 = vector.load %arg11[%c8, %c0_28] : memref<34x128xf32, #tpu.memory_space<vmem>>, vector<18x128xf32>
    tpu.vector_store %arg11[%c8, %c0_28], %53 {strides = array<i32>} : memref<34x128xf32, #tpu.memory_space<vmem>>, vector<18x128xf32>,
    %c0_29 = arith.constant 0 : index
    %c1 = arith.constant 1 : index
    %c0_30 = arith.constant 0 : index
    %60 = vector.load %arg2[%c0_29, %c1, %c0_30] : memref<1x20x128xbf16, #tpu.memory_space<vmem>>, vector<1x18x128xbf16>
    %61 = vector.shape_cast %60 : vector<1x18x128xbf16> to vector<18x128xbf16>
    %62 = tpu.concatenate %54, %61 in 1 : vector<18x128xbf16>, vector<18x128xbf16> -> vector<18x256xbf16>
    %c0_31 = arith.constant 0 : index
    %c0_32 = arith.constant 0 : index
    %63 = vector.load %arg7[%c0_31, %c0_32] : memref<256x128xbf16, #tpu.memory_space<vmem>>, vector<256x128xbf16>
    %cst_33 = arith.constant dense<0.000000e+00> : vector<18x128xf32>
    %64 = tpu.matmul %62, %63, %cst_33 {dimension_numbers = #tpu.dot_dimension_numbers<[1], [0], [0], [1], [0, 0, 1, 1], [], []>} : vector<18x256xbf16>, vector<256x128xbf16>, vector<18x128xf32> -> vector<18x128xf32>
    %c7_34 = arith.constant 7 : index
    %c0_35 = arith.constant 0 : index
    %65 = vector.load %arg11[%c7_34, %c0_35] : memref<34x128xf32, #tpu.memory_space<vmem>>, vector<18x128xf32>
    %66 = arith.truncf %65 : vector<18x128xf32> to vector<18x128xbf16>
    %c0_36 = arith.constant 0 : index
    %c0_37 = arith.constant 0 : index
    %c0_38 = arith.constant 0 : index
    %67 = vector.load %arg6[%c0_36, %c0_37, %c0_38] : memref<2x128x128xbf16, #tpu.memory_space<vmem>>, vector<1x128x128xbf16>
    %68 = vector.shape_cast %67 : vector<1x128x128xbf16> to vector<128x128xbf16>
    %cst_39 = arith.constant dense<0.000000e+00> : vector<18x128xf32>
    %69 = tpu.matmul %66, %68, %cst_39 {dimension_numbers = #tpu.dot_dimension_numbers<[1], [0], [0], [1], [0, 0, 1, 1], [], []>} : vector<18x128xbf16>, vector<128x128xbf16>, vector<18x128xf32> -> vector<18x128xf32>
    %70 = arith.addf %64, %69 : vector<18x128xf32>
    %c9 = arith.constant 9 : index
    %c0_40 = arith.constant 0 : index
    %71 = vector.load %arg11[%c9, %c0_40] : memref<34x128xf32, #tpu.memory_space<vmem>>, vector<18x128xf32>
    %72 = arith.truncf %71 : vector<18x128xf32> to vector<18x128xbf16>
    %c1_41 = arith.constant 1 : index
    %c0_42 = arith.constant 0 : index
    %c0_43 = arith.constant 0 : index
    %73 = vector.load %arg6[%c1_41, %c0_42, %c0_43] : memref<2x128x128xbf16, #tpu.memory_space<vmem>>, vector<1x128x128xbf16>
    %74 = vector.shape_cast %73 : vector<1x128x128xbf16> to vector<128x128xbf16>
    %cst_44 = arith.constant dense<0.000000e+00> : vector<18x128xf32>
    %75 = tpu.matmul %72, %74, %cst_44 {dimension_numbers = #tpu.dot_dimension_numbers<[1], [0], [0], [1], [0, 0, 1, 1], [], []>} : vector<18x128xbf16>, vector<128x128xbf16>, vector<18x128xf32> -> vector<18x128xf32>
    %76 = arith.addf %70, %75 : vector<18x128xf32>
    %c0_45 = arith.constant 0 : index
    %c0_46 = arith.constant 0 : index
    %77 = vector.load %arg8[%c0_45, %c0_46] : memref<1x128xf32, #tpu.memory_space<vmem>>, vector<1x128xf32>
    %78 = vector.broadcast %77 : vector<1x128xf32> to vector<18x128xf32>
    %79 = arith.addf %76, %78 : vector<18x128xf32>
    %80 = arith.truncf %79 : vector<18x128xf32> to vector<18x128xbf16>
    %c0_47 = arith.constant 0 : index
    %c0_48 = arith.constant 0 : index
    %c0_49 = arith.constant 0 : index
    %81 = vector.load %arg9[%c0_47, %c0_48, %c0_49] : memref<1x18x128xbf16, #tpu.memory_space<vmem>>, vector<1x18x128xbf16>
    %82 = vector.shape_cast %81 : vector<1x18x128xbf16> to vector<18x128xbf16>
    %83 = vector.shape_cast %80 : vector<18x128xbf16> to vector<1x18x128xbf16>
    tpu.vector_store %arg9[%c0_47, %c0_48, %c0_49], %83 {strides = array<i32>} : memref<1x18x128xbf16, #tpu.memory_space<vmem>>, vector<1x18x128xbf16>,
    %84 = vector.broadcast %1 : vector<18x1xf32> to vector<18x128xf32>
    %85 = arith.mulf %79, %84 : vector<18x128xf32>
    %cst_50 = arith.constant dense<0.000000e+00> : vector<128xf32>
    %86 = vector.multi_reduction <add>, %85, %cst_50 [0] : vector<18x128xf32> to vector<128xf32>
    %87 = vector.shape_cast %86 : vector<128xf32> to vector<1x128xf32>
    %c0_51 = arith.constant 0 : index
    %c0_52 = arith.constant 0 : index
    %c0_53 = arith.constant 0 : index
    %88 = vector.load %arg10[%c0_51, %c0_52, %c0_53] : memref<1x2x128xf32, #tpu.memory_space<vmem>>, vector<1x1x128xf32>
    %89 = vector.shape_cast %88 : vector<1x1x128xf32> to vector<1x128xf32>
    %90 = vector.shape_cast %87 : vector<1x128xf32> to vector<1x1x128xf32>
    tpu.vector_store %arg10[%c0_51, %c0_52, %c0_53], %90 {strides = array<i32>} : memref<1x2x128xf32, #tpu.memory_space<vmem>>, vector<1x1x128xf32>,
    %91 = arith.mulf %85, %79 : vector<18x128xf32>
    %cst_54 = arith.constant dense<0.000000e+00> : vector<128xf32>
    %92 = vector.multi_reduction <add>, %91, %cst_54 [0] : vector<18x128xf32> to vector<128xf32>
    %93 = vector.shape_cast %92 : vector<128xf32> to vector<1x128xf32>
    %c0_55 = arith.constant 0 : index
    %c1_56 = arith.constant 1 : index
    %c0_57 = arith.constant 0 : index
    %94 = vector.load %arg10[%c0_55, %c1_56, %c0_57] : memref<1x2x128xf32, #tpu.memory_space<vmem>>, vector<1x1x128xf32>
    %95 = vector.shape_cast %94 : vector<1x1x128xf32> to vector<1x128xf32>
    %96 = vector.shape_cast %93 : vector<1x128xf32> to vector<1x1x128xf32>
    tpu.vector_store %arg10[%c0_55, %c1_56, %c0_57], %96 {strides = array<i32>} : memref<1x2x128xf32, #tpu.memory_space<vmem>>, vector<1x1x128xf32>,
    return
  }
  func.func @transform_0(%arg0: i32) -> (i32, i32, i32) {
    %c0_i32 = arith.constant 0 : i32
    %c0_i32_0 = arith.constant 0 : i32
    %c0_i32_1 = arith.constant 0 : i32
    return %arg0, %c0_i32, %c0_i32_0 : i32, i32, i32
  }
  func.func @transform_1(%arg0: i32) -> (i32, i32, i32) {
    %c0_i32 = arith.constant 0 : i32
    %c0_i32_0 = arith.constant 0 : i32
    %c0_i32_1 = arith.constant 0 : i32
    return %arg0, %c0_i32, %c0_i32_0 : i32, i32, i32
  }
  func.func @transform_2(%arg0: i32) -> (i32, i32, i32) {
    %c0_i32 = arith.constant 0 : i32
    %c0_i32_0 = arith.constant 0 : i32
    %c0_i32_1 = arith.constant 0 : i32
    return %arg0, %c0_i32, %c0_i32_0 : i32, i32, i32
  }
  func.func @transform_3(%arg0: i32) -> (i32, i32) {
    %c0_i32 = arith.constant 0 : i32
    %c0_i32_0 = arith.constant 0 : i32
    %c0_i32_1 = arith.constant 0 : i32
    return %c0_i32, %c0_i32_0 : i32, i32
  }
  func.func @transform_4(%arg0: i32) -> (i32, i32) {
    %c0_i32 = arith.constant 0 : i32
    %c0_i32_0 = arith.constant 0 : i32
    %c0_i32_1 = arith.constant 0 : i32
    return %c0_i32, %c0_i32_0 : i32, i32
  }
  func.func @transform_5(%arg0: i32) -> (i32, i32, i32) {
    %c0_i32 = arith.constant 0 : i32
    %c0_i32_0 = arith.constant 0 : i32
    %c0_i32_1 = arith.constant 0 : i32
    %c0_i32_2 = arith.constant 0 : i32
    return %c0_i32, %c0_i32_0, %c0_i32_1 : i32, i32, i32
  }
  func.func @transform_6(%arg0: i32) -> (i32, i32) {
    %c0_i32 = arith.constant 0 : i32
    %c0_i32_0 = arith.constant 0 : i32
    %c0_i32_1 = arith.constant 0 : i32
    return %c0_i32, %c0_i32_0 : i32, i32
  }
  func.func @transform_7(%arg0: i32) -> (i32, i32) {
    %c0_i32 = arith.constant 0 : i32
    %c0_i32_0 = arith.constant 0 : i32
    %c0_i32_1 = arith.constant 0 : i32
    return %c0_i32, %c0_i32_0 : i32, i32
  }
  func.func @transform_8(%arg0: i32) -> (i32, i32, i32) {
    %c0_i32 = arith.constant 0 : i32
    %c0_i32_0 = arith.constant 0 : i32
    %c0_i32_1 = arith.constant 0 : i32
    return %arg0, %c0_i32, %c0_i32_0 : i32, i32, i32
  }
  func.func @transform_9(%arg0: i32) -> (i32, i32, i32) {
    %c0_i32 = arith.constant 0 : i32
    %c0_i32_0 = arith.constant 0 : i32
    %c0_i32_1 = arith.constant 0 : i32
    return %arg0, %c0_i32, %c0_i32_0 : i32, i32, i32
  }
}

module attributes {stable_mosaic.version = 11 : i64} {
  func.func @_bn2_gelu_kernel(%arg0: i32, %arg1: memref<1x18x128xbf16, #tpu.memory_space<vmem>>, %arg2: memref<1x128xf32, #tpu.memory_space<vmem>>, %arg3: memref<1x128xf32, #tpu.memory_space<vmem>>, %arg4: memref<1x16x128xf32, #tpu.memory_space<vmem>>) attributes {dimension_semantics = [#tpu.dimension_semantics<parallel>], iteration_bounds = array<i64: 2>, scalar_prefetch = 0 : i64, scratch_operands = 0 : i64, tpu.core_type = #tpu.core_type<tc>, window_params = [{transform_indices = @transform_0, window_bounds = array<i64: 1, 18, 128>}, {pipeline_mode = #tpu.pipeline_mode<synchronous>, transform_indices = @transform_1, window_bounds = array<i64: 1, 128>}, {pipeline_mode = #tpu.pipeline_mode<synchronous>, transform_indices = @transform_2, window_bounds = array<i64: 1, 128>}, {transform_indices = @transform_3, window_bounds = array<i64: 1, 16, 128>}]} {
    %c0 = arith.constant 0 : index
    %c0_0 = arith.constant 0 : index
    %0 = vector.load %arg2[%c0, %c0_0] : memref<1x128xf32, #tpu.memory_space<vmem>>, vector<1x128xf32>
    %c0_1 = arith.constant 0 : index
    %c0_2 = arith.constant 0 : index
    %1 = vector.load %arg3[%c0_1, %c0_2] : memref<1x128xf32, #tpu.memory_space<vmem>>, vector<1x128xf32>
    %c0_3 = arith.constant 0 : index
    %c1 = arith.constant 1 : index
    %c0_4 = arith.constant 0 : index
    %2 = vector.load %arg1[%c0_3, %c1, %c0_4] : memref<1x18x128xbf16, #tpu.memory_space<vmem>>, vector<1x16x128xbf16>
    %3 = vector.shape_cast %2 : vector<1x16x128xbf16> to vector<16x128xbf16>
    %4 = arith.extf %3 : vector<16x128xbf16> to vector<16x128xf32>
    %5 = vector.broadcast %0 : vector<1x128xf32> to vector<16x128xf32>
    %6 = arith.mulf %4, %5 : vector<16x128xf32>
    %7 = vector.broadcast %1 : vector<1x128xf32> to vector<16x128xf32>
    %8 = arith.addf %6, %7 : vector<16x128xf32>
    %cst = arith.constant 5.000000e-01 : f32
    %9 = vector.broadcast %cst : f32 to vector<16x128xf32>
    %10 = arith.mulf %9, %8 : vector<16x128xf32>
    %cst_5 = arith.constant 0.707106769 : f32
    %11 = vector.broadcast %cst_5 : f32 to vector<16x128xf32>
    %12 = arith.mulf %8, %11 : vector<16x128xf32>
    %cst_6 = arith.constant 0.000000e+00 : f32
    %13 = vector.broadcast %cst_6 : f32 to vector<16x128xf32>
    %14 = arith.cmpf olt, %12, %13 : vector<16x128xf32>
    %cst_7 = arith.constant -1.000000e+00 : f32
    %cst_8 = arith.constant 1.000000e+00 : f32
    %15 = vector.broadcast %cst_7 : f32 to vector<16x128xf32>
    %16 = vector.broadcast %cst_8 : f32 to vector<16x128xf32>
    %17 = arith.select %14, %15, %16 : vector<16x128xi1>, vector<16x128xf32>
    %18 = math.absf %12 : vector<16x128xf32>
    %cst_9 = arith.constant 0.327591091 : f32
    %19 = vector.broadcast %cst_9 : f32 to vector<16x128xf32>
    %20 = arith.mulf %19, %18 : vector<16x128xf32>
    %cst_10 = arith.constant 1.000000e+00 : f32
    %21 = vector.broadcast %cst_10 : f32 to vector<16x128xf32>
    %22 = arith.addf %21, %20 : vector<16x128xf32>
    %cst_11 = arith.constant 1.000000e+00 : f32
    %23 = vector.broadcast %cst_11 : f32 to vector<16x128xf32>
    %24 = arith.divf %23, %22 : vector<16x128xf32>
    %cst_12 = arith.constant 1.06140542 : f32
    %25 = vector.broadcast %cst_12 : f32 to vector<16x128xf32>
    %26 = arith.mulf %25, %24 : vector<16x128xf32>
    %cst_13 = arith.constant -1.45315206 : f32
    %27 = vector.broadcast %cst_13 : f32 to vector<16x128xf32>
    %28 = arith.addf %26, %27 : vector<16x128xf32>
    %29 = arith.mulf %28, %24 : vector<16x128xf32>
    %cst_14 = arith.constant 1.42141378 : f32
    %30 = vector.broadcast %cst_14 : f32 to vector<16x128xf32>
    %31 = arith.addf %29, %30 : vector<16x128xf32>
    %32 = arith.mulf %31, %24 : vector<16x128xf32>
    %cst_15 = arith.constant -0.284496725 : f32
    %33 = vector.broadcast %cst_15 : f32 to vector<16x128xf32>
    %34 = arith.addf %32, %33 : vector<16x128xf32>
    %35 = arith.mulf %34, %24 : vector<16x128xf32>
    %cst_16 = arith.constant 0.254829586 : f32
    %36 = vector.broadcast %cst_16 : f32 to vector<16x128xf32>
    %37 = arith.addf %35, %36 : vector<16x128xf32>
    %38 = arith.mulf %37, %24 : vector<16x128xf32>
    %cst_17 = arith.constant 0.000000e+00 : f32
    %39 = vector.broadcast %cst_17 : f32 to vector<16x128xf32>
    %40 = arith.subf %39, %18 : vector<16x128xf32>
    %41 = arith.mulf %40, %18 : vector<16x128xf32>
    %42 = math.exp %41 : vector<16x128xf32>
    %43 = arith.mulf %38, %42 : vector<16x128xf32>
    %cst_18 = arith.constant 1.000000e+00 : f32
    %44 = vector.broadcast %cst_18 : f32 to vector<16x128xf32>
    %45 = arith.subf %44, %43 : vector<16x128xf32>
    %46 = arith.mulf %17, %45 : vector<16x128xf32>
    %cst_19 = arith.constant 1.000000e+00 : f32
    %47 = vector.broadcast %cst_19 : f32 to vector<16x128xf32>
    %48 = arith.addf %47, %46 : vector<16x128xf32>
    %49 = arith.mulf %10, %48 : vector<16x128xf32>
    %c0_20 = arith.constant 0 : index
    %c0_21 = arith.constant 0 : index
    %c0_22 = arith.constant 0 : index
    %50 = vector.load %arg4[%c0_20, %c0_21, %c0_22] : memref<1x16x128xf32, #tpu.memory_space<vmem>>, vector<1x16x128xf32>
    %51 = vector.shape_cast %50 : vector<1x16x128xf32> to vector<16x128xf32>
    %52 = vector.shape_cast %49 : vector<16x128xf32> to vector<1x16x128xf32>
    tpu.vector_store %arg4[%c0_20, %c0_21, %c0_22], %52 {strides = array<i32>} : memref<1x16x128xf32, #tpu.memory_space<vmem>>, vector<1x16x128xf32>,
    return
  }
  func.func @transform_0(%arg0: i32) -> (i32, i32, i32) {
    %c0_i32 = arith.constant 0 : i32
    %c0_i32_0 = arith.constant 0 : i32
    %c0_i32_1 = arith.constant 0 : i32
    return %arg0, %c0_i32, %c0_i32_0 : i32, i32, i32
  }
  func.func @transform_1(%arg0: i32) -> (i32, i32) {
    %c0_i32 = arith.constant 0 : i32
    %c0_i32_0 = arith.constant 0 : i32
    %c0_i32_1 = arith.constant 0 : i32
    return %c0_i32, %c0_i32_0 : i32, i32
  }
  func.func @transform_2(%arg0: i32) -> (i32, i32) {
    %c0_i32 = arith.constant 0 : i32
    %c0_i32_0 = arith.constant 0 : i32
    %c0_i32_1 = arith.constant 0 : i32
    return %c0_i32, %c0_i32_0 : i32, i32
  }
  func.func @transform_3(%arg0: i32) -> (i32, i32, i32) {
    %c0_i32 = arith.constant 0 : i32
    %c0_i32_0 = arith.constant 0 : i32
    %c0_i32_1 = arith.constant 0 : i32
    return %arg0, %c0_i32, %c0_i32_0 : i32, i32, i32
  }
}

</mosaic_0001>

<llo_original>
// kernel: tile.38
$region0: #{tile.38}
  #allocation0 [shape = 's32[1]{0}', space=sflag, size = 0x4, scoped, tag = 'scoped memory for tile.38']
  %s0 = inlined_call_operand.vmem [shape: f32[8], index: 0, kind: input, shape index: {}]
  %s1 = inlined_call_operand.vmem [shape: f32[16,1,1,8], index: 1, kind: output, shape index: {}]
  // Predicated region
  $region2: #{tile.38} parent=0 // pred_check
    _
  $region3: #{tile.38} parent=0 // pred_check_branch
    %3 = sbr.rel (0) target = $region5
  $region4: #{tile.38} parent=0 // pred_region
    _
  $region5: #{tile.38} parent=0 // pred_fallthru
    _
  %v4 = vld [vmem:[%s0] ss:$0 sm:$0xff]
  %5 = vst [vmem:[%s1] sm:$0xff] %v4
  %s6 = scalar_lea.vmem %s1, 8
  %7 = vst [vmem:[%s6] sm:$0xff] %v4

// kernel: tile.39
$region0: #{tile.39}
  %s0 = inlined_call_operand.vmem [shape: f32[16,1,1,8], index: 0, kind: input, shape index: {}]
  %s1 = inlined_call_operand.vmem [shape: f32[1,128], index: 1, kind: output, shape index: {}]
  $region1: #{tile.39} parent=0
    #allocation0 [shape = 'u8[4096]{0}', space=vmem, size = 0x1000, scoped, tag = 'scoped mem for output reshape']
    %v2 = vld [vmem:[%s0] sm:$0x1]
    %vm3 = vcmask 64512
    %4 = vst.msk [vmem:[#allocation0] sm:$0x1] %vm3, %v2
    %s5 = scalar_lea.vmem %s0, 15
    %v6 = vld [vmem:[%s5] sm:$0x1]
    %7 = vrot.lane.b32.xlu0 %v6, 120
    %v8 = vpop.permute.xlu0 %7
    %vm9 = vcmask 1048512
    %10 = vst.msk [vmem:[#allocation0] sm:$0x1] %vm9, %v8
    %s11 = scalar_lea.vmem %s0, 14
    %v12 = vld [vmem:[%s11] sm:$0x1]
    %13 = vrot.lane.b32.xlu0 %v12, 112
    %v14 = vpop.permute.xlu0 %13
    %vm15 = vcmask 982912
    %16 = vst.msk [vmem:[#allocation0] sm:$0x1] %vm15, %v14
    %s17 = scalar_lea.vmem %s0, 13
    %v18 = vld [vmem:[%s17] sm:$0x1]
    %19 = vrot.lane.b32.xlu0 %v18, 104
    %v20 = vpop.permute.xlu0 %19
    %vm21 = vcmask 917312
    %22 = vst.msk [vmem:[#allocation0] sm:$0x1] %vm21, %v20
    %s23 = scalar_lea.vmem %s0, 12
    %v24 = vld [vmem:[%s23] sm:$0x1]
    %25 = vrot.lane.b32.xlu0 %v24, 96
    %v26 = vpop.permute.xlu0 %25
    %vm27 = vcmask 851712
    %28 = vst.msk [vmem:[#allocation0] sm:$0x1] %vm27, %v26
    %s29 = scalar_lea.vmem %s0, 11
    %v30 = vld [vmem:[%s29] sm:$0x1]
    %31 = vrot.lane.b32.xlu0 %v30, 88
    %v32 = vpop.permute.xlu0 %31
    %vm33 = vcmask 786112
    %34 = vst.msk [vmem:[#allocation0] sm:$0x1] %vm33, %v32
    %s35 = scalar_lea.vmem %s0, 10
    %v36 = vld [vmem:[%s35] sm:$0x1]
    %37 = vrot.lane.b32.xlu0 %v36, 80
    %v38 = vpop.permute.xlu0 %37
    %vm39 = vcmask 720512
    %40 = vst.msk [vmem:[#allocation0] sm:$0x1] %vm39, %v38
    %s41 = scalar_lea.vmem %s0, 9
    %v42 = vld [vmem:[%s41] sm:$0x1]
    %43 = vrot.lane.b32.xlu0 %v42, 72
    %v44 = vpop.permute.xlu0 %43
    %vm45 = vcmask 654912
    %46 = vst.msk [vmem:[#allocation0] sm:$0x1] %vm45, %v44
    %s47 = scalar_lea.vmem %s0, 8
    %v48 = vld [vmem:[%s47] sm:$0x1]
    %49 = vrot.lane.b32.xlu0 %v48, 64
    %v50 = vpop.permute.xlu0 %49
    %vm51 = vcmask 589312
    %52 = vst.msk [vmem:[#allocation0] sm:$0x1] %vm51, %v50
    %s53 = scalar_lea.vmem %s0, 7
    %v54 = vld [vmem:[%s53] sm:$0x1]
    %55 = vrot.lane.b32.xlu0 %v54, 56
    %v56 = vpop.permute.xlu0 %55
    %vm57 = vcmask 523712
    %58 = vst.msk [vmem:[#allocation0] sm:$0x1] %vm57, %v56
    %s59 = scalar_lea.vmem %s0, 6
    %v60 = vld [vmem:[%s59] sm:$0x1]
    %61 = vrot.lane.b32.xlu0 %v60, 48
    %v62 = vpop.permute.xlu0 %61
    %vm63 = vcmask 458112
    %64 = vst.msk [vmem:[#allocation0] sm:$0x1] %vm63, %v62
    %s65 = scalar_lea.vmem %s0, 5
    %v66 = vld [vmem:[%s65] sm:$0x1]
    %67 = vrot.lane.b32.xlu0 %v66, 40
    %v68 = vpop.permute.xlu0 %67
    %vm69 = vcmask 392512
    %70 = vst.msk [vmem:[#allocation0] sm:$0x1] %vm69, %v68
    %s71 = scalar_lea.vmem %s0, 4
    %v72 = vld [vmem:[%s71] sm:$0x1]
    %73 = vrot.lane.b32.xlu0 %v72, 32
    %v74 = vpop.permute.xlu0 %73
    %vm75 = vcmask 326912
    %76 = vst.msk [vmem:[#allocation0] sm:$0x1] %vm75, %v74
    %s77 = scalar_lea.vmem %s0, 3
    %v78 = vld [vmem:[%s77] sm:$0x1]
    %79 = vrot.lane.b32.xlu0 %v78, 24
    %v80 = vpop.permute.xlu0 %79
    %vm81 = vcmask 261312
    %82 = vst.msk [vmem:[#allocation0] sm:$0x1] %vm81, %v80
    %s83 = scalar_lea.vmem %s0, 2
    %v84 = vld [vmem:[%s83] sm:$0x1]
    %85 = vrot.lane.b32.xlu0 %v84, 16
    %v86 = vpop.permute.xlu0 %85
    %vm87 = vcmask 195712
    %88 = vst.msk [vmem:[#allocation0] sm:$0x1] %vm87, %v86
    %s89 = scalar_lea.vmem %s0, 1
    %v90 = vld [vmem:[%s89] sm:$0x1]
    %91 = vrot.lane.b32.xlu0 %v90, 8
    %v92 = vpop.permute.xlu0 %91
    %vm93 = vcmask 130112
    %94 = vst.msk [vmem:[#allocation0] sm:$0x1] %vm93, %v92
    %s96 = sshllo.u32 0, 1
    %v98 = vld [vmem:[#allocation0] sm:%s96]
    %s99 = sshllo.u32 0, 1
    %100 = vst [vmem:[%s1] sm:%s99] %v98

// kernel: conv2d_res_block.3
$region0: #{conv2d_res_block.3}
  #allocation0 [shape = 'u32[]', space=smem, size = 0x4, offset = 0x4, fixed_abs, tag = 'smem constant byte address 0x4 - core index']
  #allocation1 [shape = 'u32[144,128]{1,0:T(1,128)}', space=vmem, size = 0x12000, scoped, tag = 'internal scratch']
  %s0 = inlined_call_operand.vmem [shape: bf16[2,20,128], index: 0, kind: input, shape index: {}]
  %s1 = inlined_call_operand.vmem [shape: bf16[3,128,128], index: 1, kind: input, shape index: {}]
  %s2 = inlined_call_operand.vmem [shape: f32[1,128], index: 2, kind: input, shape index: {}]
  %s3 = inlined_call_operand.vmem [shape: f32[2,18,1], index: 3, kind: input, shape index: {}]
  %s4 = inlined_call_operand.vmem [shape: bf16[2,18,128], index: 4, kind: output, shape index: {0}]
  %s5 = inlined_call_operand.vmem [shape: f32[2,2,128], index: 5, kind: output, shape index: {1}]
  %6 = xla_tuple %s4, %s5
  %s7 = sld [smem:[#allocation0]]
  $region57: #{conv2d_res_block.3} parent=0
    _
  %s9 = ssub.s32 1, %s7
  %s10 = scalar_select 0, %s9, %s7
  loop: start=0, step=1, limit=4
  $region2: #{conv2d_res_block.3} parent=0 // loop_pre_header
    _
  $region3: #{conv2d_res_block.3} parent=0 // loop_header
    %s12 = sphi 0, %s16
    %p13 = scmp.ge.s32.totalorder %s12, 4
    %s22 = sphi 0, %s24
    %s25 = sphi 0, %s22
    %s26 = sphi 0, %s25
    %s42 = sphi 0, %s26
    %s46 = sphi 0, %s46
    %s48 = sphi 0, %s46
    %s49 = sphi 0, %s48
    %s63 = sphi 0, %s49
    %s67 = sphi 0, %s67
    %s69 = sphi 0, %s67
    %s70 = sphi 0, %s69
    %s84 = sphi 0, %s70
    %s90 = sphi 0, %s92
    %s93 = sphi 0, %s90
    %s94 = sphi 0, %s93
    %s110 = sphi 0, %s94
    %s116 = sphi 0, %s118
    %s119 = sphi 0, %s116
    %s120 = sphi 0, %s119
    %s136 = sphi 0, %s120
    %s142 = sphi 0, %s144
    %s145 = sphi 0, %s142
    %s146 = sphi 0, %s145
    %s162 = sphi 0, %s146
  $region4: #{conv2d_res_block.3} parent=0 // loop_header_branch
    %15 = sbr.rel (%p13) target = $region8
  $region5: #{conv2d_res_block.3} parent=0 // loop_body
    %s17 = ssub.s32 %s12, 1
    %s18 = ssub.s32 %s12, 2
    %s19 = sadd.s32 %s12, 1
    %s20 = ssub.s32 %s12, %s19
    %p21 = scmp.eq.s32.totalorder %s20, 0
    %s23 = sadd.s32 %s22, 1
    %s24 = scalar_select %p21, %s22, %s23
    %p27 = pneg %p21
    %p28 = scmp.eq.s32.totalorder %s12, 1
    %p29 = por %p27, %p28
    %p30 = scmp.ne.s32.totalorder %s22, %s25
    %p31 = scmp.eq.s32.totalorder %s12, 0
    %p32 = por %p30, %p31
    %p33 = scmp.ne.s32.totalorder %s22, %s25
    %p34 = scmp.eq.s32.totalorder %s17, 1
    %p35 = por %p33, %p34
    %p36 = scmp.ne.s32.totalorder %s25, %s26
    %p37 = scmp.eq.s32.totalorder %s17, 0
    %p38 = por %p36, %p37
    %p39 = scmp.ne.s32.totalorder %s25, %s26
    %p40 = scmp.eq.s32.totalorder %s18, 1
    %p41 = por %p39, %p40
    %p43 = scmp.ne.s32.totalorder %s26, %s42
    %p44 = scmp.eq.s32.totalorder %s18, 0
    %p45 = por %p43, %p44
    %s47 = sadd.s32 %s46, 1
    %p50 = scmp.eq.s32.totalorder %s12, 1
    %p51 = scmp.ne.s32.totalorder %s46, %s48
    %p52 = scmp.eq.s32.totalorder %s12, 0
    %p53 = por %p51, %p52
    %p54 = scmp.ne.s32.totalorder %s46, %s48
    %p55 = scmp.eq.s32.totalorder %s17, 1
    %p56 = por %p54, %p55
    %p57 = scmp.ne.s32.totalorder %s48, %s49
    %p58 = scmp.eq.s32.totalorder %s17, 0
    %p59 = por %p57, %p58
    %p60 = scmp.ne.s32.totalorder %s48, %s49
    %p61 = scmp.eq.s32.totalorder %s18, 1
    %p62 = por %p60, %p61
    %p64 = scmp.ne.s32.totalorder %s49, %s63
    %p65 = scmp.eq.s32.totalorder %s18, 0
    %p66 = por %p64, %p65
    %s68 = sadd.s32 %s67, 1
    %p71 = scmp.eq.s32.totalorder %s12, 1
    %p72 = scmp.ne.s32.totalorder %s67, %s69
    %p73 = scmp.eq.s32.totalorder %s12, 0
    %p74 = por %p72, %p73
    %p75 = scmp.ne.s32.totalorder %s67, %s69
    %p76 = scmp.eq.s32.totalorder %s17, 1
    %p77 = por %p75, %p76
    %p78 = scmp.ne.s32.totalorder %s69, %s70
    %p79 = scmp.eq.s32.totalorder %s17, 0
    %p80 = por %p78, %p79
    %p81 = scmp.ne.s32.totalorder %s69, %s70
    %p82 = scmp.eq.s32.totalorder %s18, 1
    %p83 = por %p81, %p82
    %p85 = scmp.ne.s32.totalorder %s70, %s84
    %p86 = scmp.eq.s32.totalorder %s18, 0
    %p87 = por %p85, %p86
    %s88 = ssub.s32 %s12, %s19
    %p89 = scmp.eq.s32.totalorder %s88, 0
    %s91 = sadd.s32 %s90, 1
    %s92 = scalar_select %p89, %s90, %s91
    %p95 = pneg %p89
    %p96 = scmp.eq.s32.totalorder %s12, 1
    %p97 = por %p95, %p96
    %p98 = scmp.ne.s32.totalorder %s90, %s93
    %p99 = scmp.eq.s32.totalorder %s12, 0
    %p100 = por %p98, %p99
    %p101 = scmp.ne.s32.totalorder %s90, %s93
    %p102 = scmp.eq.s32.totalorder %s17, 1
    %p103 = por %p101, %p102
    %p104 = scmp.ne.s32.totalorder %s93, %s94
    %p105 = scmp.eq.s32.totalorder %s17, 0
    %p106 = por %p104, %p105
    %p107 = scmp.ne.s32.totalorder %s93, %s94
    %p108 = scmp.eq.s32.totalorder %s18, 1
    %p109 = por %p107, %p108
    %p111 = scmp.ne.s32.totalorder %s94, %s110
    %p112 = scmp.eq.s32.totalorder %s18, 0
    %p113 = por %p111, %p112
    %s114 = ssub.s32 %s12, %s19
    %p115 = scmp.eq.s32.totalorder %s114, 0
    %s117 = sadd.s32 %s116, 1
    %s118 = scalar_select %p115, %s116, %s117
    %p121 = pneg %p115
    %p122 = scmp.eq.s32.totalorder %s12, 1
    %p123 = por %p121, %p122
    %p124 = scmp.ne.s32.totalorder %s116, %s119
    %p125 = scmp.eq.s32.totalorder %s12, 0
    %p126 = por %p124, %p125
    %p127 = scmp.ne.s32.totalorder %s116, %s119
    %p128 = scmp.eq.s32.totalorder %s17, 1
    %p129 = por %p127, %p128
    %p130 = scmp.ne.s32.totalorder %s119, %s120
    %p131 = scmp.eq.s32.totalorder %s17, 0
    %p132 = por %p130, %p131
    %p133 = scmp.ne.s32.totalorder %s119, %s120
    %p134 = scmp.eq.s32.totalorder %s18, 1
    %p135 = por %p133, %p134
    %p137 = scmp.ne.s32.totalorder %s120, %s136
    %p138 = scmp.eq.s32.totalorder %s18, 0
    %p139 = por %p137, %p138
    %s140 = ssub.s32 %s12, %s19
    %p141 = scmp.eq.s32.totalorder %s140, 0
    %s143 = sadd.s32 %s142, 1
    %s144 = scalar_select %p141, %s142, %s143
    %p147 = pneg %p141
    %p148 = scmp.eq.s32.totalorder %s12, 1
    %p149 = por %p147, %p148
    %p150 = scmp.ne.s32.totalorder %s142, %s145
    %p151 = scmp.eq.s32.totalorder %s12, 0
    %p152 = por %p150, %p151
    %p153 = scmp.ne.s32.totalorder %s142, %s145
    %p154 = scmp.eq.s32.totalorder %s17, 1
    %p155 = por %p153, %p154
    %p156 = scmp.ne.s32.totalorder %s145, %s146
    %p157 = scmp.eq.s32.totalorder %s17, 0
    %p158 = por %p156, %p157
    %p159 = scmp.ne.s32.totalorder %s145, %s146
    %p160 = scmp.eq.s32.totalorder %s18, 1
    %p161 = por %p159, %p160
    %p163 = scmp.ne.s32.totalorder %s146, %s162
    %p164 = scmp.eq.s32.totalorder %s18, 0
    %p165 = por %p163, %p164
    %p166 = scmp.le.s32.totalorder 1, %s12
    %p167 = scmp.lt.s32.totalorder %s12, 3
    %p168 = pnand %p166, %p167
    %p169 = pneg %p168
    // Predicated region
    $region9: #{conv2d_res_block.3} parent=5 // pred_check
      _
    $region10: #{conv2d_res_block.3} parent=5 // pred_check_branch
      %171 = sbr.rel (%p168) target = $region12
    $region11: #{conv2d_res_block.3} parent=5 // pred_region
      %s172 = ssub.s32 %s12, 1
      // Predicated region
      $region13: #{conv2d_res_block.3} parent=11 // pred_check
        %p173 = pneg %p59
      $region14: #{conv2d_res_block.3} parent=11 // pred_check_branch
        %175 = sbr.rel (%p173) target = $region16
      $region15: #{conv2d_res_block.3} parent=11 // pred_region
        _
      $region16: #{conv2d_res_block.3} parent=11 // pred_fallthru
        _
      // Predicated region
      $region17: #{conv2d_res_block.3} parent=11 // pred_check
        %p176 = pneg %p80
      $region18: #{conv2d_res_block.3} parent=11 // pred_check_branch
        %178 = sbr.rel (%p176) target = $region20
      $region19: #{conv2d_res_block.3} parent=11 // pred_region
        _
      $region20: #{conv2d_res_block.3} parent=11 // pred_fallthru
        _
    $region12: #{conv2d_res_block.3} parent=5 // pred_fallthru
      _
    %p179 = scmp.lt.s32.totalorder %s12, 2
    // Predicated region
    $region21: #{conv2d_res_block.3} parent=5 // pred_check
      %p180 = pneg %p179
    $region22: #{conv2d_res_block.3} parent=5 // pred_check_branch
      %182 = sbr.rel (%p180) target = $region24
    $region23: #{conv2d_res_block.3} parent=5 // pred_region
      // Predicated region
      $region25: #{conv2d_res_block.3} parent=23 // pred_check
        %p183 = pneg %p32
      $region26: #{conv2d_res_block.3} parent=23 // pred_check_branch
        %185 = sbr.rel (%p183) target = $region28
      $region27: #{conv2d_res_block.3} parent=23 // pred_region
        %p186 = scmp.lt.s32.totalorder %s12, 1
        %s187 = scalar_select %p186, %s12, 1
        %s188 = smul.addr %s187, 3
        %s189 = smul.addr %s188, 4
        %s190 = scalar_lea.vmem %s0, %s189
      $region28: #{conv2d_res_block.3} parent=23 // pred_fallthru
        _
      // Predicated region
      $region29: #{conv2d_res_block.3} parent=23 // pred_check
        %p191 = pneg %p100
      $region30: #{conv2d_res_block.3} parent=23 // pred_check_branch
        %193 = sbr.rel (%p191) target = $region32
      $region31: #{conv2d_res_block.3} parent=23 // pred_region
        %p194 = scmp.lt.s32.totalorder %s12, 1
        %s195 = scalar_select %p194, %s12, 1
        %s196 = smul.addr %s195, 3
        %s197 = smul.addr %s196, 8
        %s198 = scalar_lea.vmem %s3, %s197
      $region32: #{conv2d_res_block.3} parent=23 // pred_fallthru
        _
    $region24: #{conv2d_res_block.3} parent=5 // pred_fallthru
      _
    %p199 = scmp.le.s32.totalorder 1, %s12
    %p200 = scmp.lt.s32.totalorder %s12, 3
    %p201 = pnand %p199, %p200
    %p202 = pneg %p201
    // Predicated region
    $region33: #{conv2d_res_block.3} parent=5 // pred_check
      _
    $region34: #{conv2d_res_block.3} parent=5 // pred_check_branch
      %204 = sbr.rel (%p201) target = $region36
    $region35: #{conv2d_res_block.3} parent=5 // pred_region
      %s205 = ssub.s32 %s12, 1
      %p206 = scmp.lt.s32.totalorder %s17, 1
      %s207 = scalar_select %p206, %s17, 1
      %s208 = smul.addr %s207, 3
      %s209 = smul.addr %s208, 4
      %s210 = scalar_lea.vmem %s0, %s209
      %p211 = pneg %p38
      %p212 = pneg %p35
      %p213 = pneg %p59
      %p214 = pneg %p56
      %p215 = pneg %p80
      %p216 = pneg %p77
      %p217 = scmp.lt.s32.totalorder %s17, 1
      %s218 = scalar_select %p217, %s17, 1
      %s219 = smul.addr %s218, 3
      %s220 = smul.addr %s219, 8
      %s221 = scalar_lea.vmem %s3, %s220
      %p222 = pneg %p106
      %p223 = pneg %p103
      %p224 = pneg %p132
      %p225 = pneg %p129
      %p226 = scmp.lt.s32.totalorder %s17, 1
      %s227 = scalar_select %p226, %s17, 1
      %s228 = smul.addr %s227, 3
      %s229 = smul.addr %s228, 4
      %s230 = scalar_lea.vmem %s4, %s229
      %p231 = pneg %p158
      %p232 = pneg %p155
      %p233 = scmp.lt.s32.totalorder %s17, 1
      %s234 = scalar_select %p233, %s17, 1
      %s235 = smul.addr %s234, 2
      %s236 = scalar_lea.vmem %s5, %s235
      %p237 = scmp.lt.s32.totalorder %s17, 1
      %s238 = scalar_select %p237, %s17, 1
      %s239 = smul.addr %s238, 3
      %s240 = smul.addr %s239, 4
      %s241 = scalar_lea.vmem %s0, %s240
      %p242 = scmp.lt.s32.totalorder %s17, 1
      %s243 = scalar_select %p242, %s17, 1
      %s244 = smul.addr %s243, 3
      %s245 = smul.addr %s244, 8
      %s246 = scalar_lea.vmem %s3, %s245
      %p247 = scmp.lt.s32.totalorder %s17, 1
      %s248 = scalar_select %p247, %s17, 1
      %s249 = smul.addr %s248, 3
      %s250 = smul.addr %s249, 4
      %s251 = scalar_lea.vmem %s4, %s250
      %p252 = scmp.lt.s32.totalorder %s17, 1
      %s253 = scalar_select %p252, %s17, 1
      %s254 = smul.addr %s253, 2
      %s255 = scalar_lea.vmem %s5, %s254
      %v257 = vld [vmem:[%s241] sm:$0xf]
      %v258 = vld [vmem:[%s241 + $0x4] sm:$0xf]
      %v259 = vld [vmem:[%s241 + $0x8] sm:$0x1]
      %v260 = vld [vmem:[%s1] sm:$0xf]
      %v261 = vld [vmem:[%s1 + $0x4] sm:$0xf]
      %v262 = vld [vmem:[%s1 + $0x8] sm:$0xf]
      %v263 = vld [vmem:[%s1 + $0xc] sm:$0xf]
      %v264 = vld [vmem:[%s1 + $0x10] sm:$0xf]
      %v265 = vld [vmem:[%s1 + $0x14] sm:$0xf]
      %v266 = vld [vmem:[%s1 + $0x18] sm:$0xf]
      %v267 = vld [vmem:[%s1 + $0x1c] sm:$0xf]
      %v268 = vld [vmem:[%s1 + $0x20] sm:$0xf]
      %v269 = vld [vmem:[%s1 + $0x24] sm:$0xf]
      %v270 = vld [vmem:[%s1 + $0x28] sm:$0xf]
      %v271 = vld [vmem:[%s1 + $0x2c] sm:$0xf]
      %v272 = vld [vmem:[%s1 + $0x30] sm:$0xf]
      %v273 = vld [vmem:[%s1 + $0x34] sm:$0xf]
      %v274 = vld [vmem:[%s1 + $0x38] sm:$0xf]
      %v275 = vld [vmem:[%s1 + $0x3c] sm:$0xf]
      %v276 = vld [vmem:[%s241 + $0x8] sm:$0x3]
      %s277 = scalar_lea.vmem %s1, 64
      %v278 = vld [vmem:[%s277] sm:$0xf]
      %v279 = vld [vmem:[%s277 + $0x4] sm:$0xf]
      %v280 = vld [vmem:[%s277 + $0x8] sm:$0xf]
      %v281 = vld [vmem:[%s277 + $0xc] sm:$0xf]
      %v282 = vld [vmem:[%s277 + $0x10] sm:$0xf]
      %v283 = vld [vmem:[%s277 + $0x14] sm:$0xf]
      %v284 = vld [vmem:[%s277 + $0x18] sm:$0xf]
      %v285 = vld [vmem:[%s277 + $0x1c] sm:$0xf]
      %v286 = vld [vmem:[%s277 + $0x20] sm:$0xf]
      %v287 = vld [vmem:[%s277 + $0x24] sm:$0xf]
      %v288 = vld [vmem:[%s277 + $0x28] sm:$0xf]
      %v289 = vld [vmem:[%s277 + $0x2c] sm:$0xf]
      %v290 = vld [vmem:[%s277 + $0x30] sm:$0xf]
      %v291 = vld [vmem:[%s277 + $0x34] sm:$0xf]
      %v292 = vld [vmem:[%s277 + $0x38] sm:$0xf]
      %v293 = vld [vmem:[%s277 + $0x3c] sm:$0xf]
      %v297 = vunpack.c.l.b16 %v257
      %v298 = vunpack.c.l.b16 %v258
      %v299 = vunpack.c.l.b16 %v276
      %v300 = vpack.c.b16 %v298, %v297
      %v301 = vpack.c.b16 %v299, %v299
      %vm302 = vsmask.f32 7424
      %v304 = vshrl.u32 %v300, 16
      %v306 = vshll.u32 %v300, 16
      %v308 = vrot.slane %v306, 1
      %v309 = vor.u32 %v304, %v308
      %v311 = vshll.u32 %v301, 16
      %v313 = vrot.slane %v311, 1
      %v314 = vsel %vm302, %v309, %v313
      %v315 = vshrl.u32 %v301, 16
      %v317 = vor.u32 %v315, %v313
      %v336 = vunpack.c.l.b16 %v278
      %v337 = vunpack.c.l.b16 %v279
      %v338 = vunpack.c.l.b16 %v280
      %v339 = vunpack.c.l.b16 %v281
      %v340 = vunpack.c.l.b16 %v282
      %v341 = vunpack.c.l.b16 %v283
      %v342 = vunpack.c.l.b16 %v284
      %v343 = vunpack.c.l.b16 %v285
      %v344 = vunpack.c.l.b16 %v286
      %v345 = vunpack.c.l.b16 %v287
      %v346 = vunpack.c.l.b16 %v288
      %v347 = vunpack.c.l.b16 %v289
      %v348 = vunpack.c.l.b16 %v290
      %v349 = vunpack.c.l.b16 %v291
      %v350 = vunpack.c.l.b16 %v292
      %v351 = vunpack.c.l.b16 %v293
      %v352 = vpack.c.b16 %v337, %v336
      %v353 = vpack.c.b16 %v339, %v338
      %v354 = vpack.c.b16 %v341, %v340
      %v355 = vpack.c.b16 %v343, %v342
      %v356 = vpack.c.b16 %v345, %v344
      %v357 = vpack.c.b16 %v347, %v346
      %v358 = vpack.c.b16 %v349, %v348
      %v359 = vpack.c.b16 %v351, %v350
      %368 = vmatprep.subr.bf16.mxu0 0
      %369 = vmatpush1.bf16.msra.mxu0 %v352
      %370 = vmatprep.subr.bf16.mxu0 0
      %371 = vmatpush1.bf16.msra.mxu0 %v353
      %372 = vmatprep.subr.bf16.mxu0 0
      %373 = vmatpush1.bf16.msra.mxu0 %v354
      %374 = vmatprep.subr.bf16.mxu0 0
      %375 = vmatpush1.bf16.msra.mxu0 %v355
      %376 = vmatprep.subr.bf16.mxu0 0
      %377 = vmatpush1.bf16.msra.mxu0 %v356
      %378 = vmatprep.subr.bf16.mxu0 0
      %379 = vmatpush1.bf16.msra.mxu0 %v357
      %380 = vmatprep.subr.bf16.mxu0 0
      %381 = vmatpush1.bf16.msra.mxu0 %v358
      %382 = vmatprep.subr.bf16.mxu0 0
      %383 = vmatpush1.bf16.msra.mxu0 %v359
      %384 = vmatprep.subr.bf16.mxu0 0
      %385 = vmatpush1.bf16.msra.mxu0 0
      %386 = vmatprep.subr.bf16.mxu0 0
      %387 = vmatpush1.bf16.msra.mxu0 0
      %388 = vmatprep.subr.bf16.mxu0 0
      %389 = vmatpush1.bf16.msra.mxu0 0
      %390 = vmatprep.subr.bf16.mxu0 0
      %391 = vmatpush1.bf16.msra.mxu0 0
      %392 = vmatprep.subr.bf16.mxu0 0
      %393 = vmatpush1.bf16.msra.mxu0 0
      %394 = vmatprep.subr.bf16.mxu0 0
      %395 = vmatpush1.bf16.msra.mxu0 0
      %396 = vmatprep.subr.bf16.mxu0 0
      %397 = vmatpush1.bf16.msra.mxu0 0
      %398 = vmatprep.subr.bf16.mxu0 0
      %399 = vmatpush1.bf16.msra.mxu0 0
      %400 = vmatprep.mubr.bf16.mxu0 0
      %401 = vmatmul.mubr.bf16.gmra.mrb[0].mxu0 %v314
      %v402 = vpop.f32.mrb[0].mxu0
      %v403 = vadd.f32 0.0, %v402
      %v404 = vpop.f32.mrb[0].mxu0
      %v405 = vpop.f32.mrb[0].mxu0
      %v406 = vadd.f32 0.0, %v405
      %v407 = vpop.f32.mrb[0].mxu0
      %408 = vmatprep.mubr.bf16.mxu0 0
      %409 = vmatmul.mubr.bf16.gmra.mrb[0].mxu0 %v317
      %v410 = vpop.f32.mrb[0].mxu0
      %v411 = vadd.f32 0.0, %v410
      %v412 = vpop.f32.mrb[0].mxu0
      %v413 = vpop.f32.mrb[0].mxu0
      %v414 = vpop.f32.mrb[0].mxu0
      %415 = vdwg.mxu0
      %v417 = vunpack.c.l.b16 %v259
      %v418 = vpack.c.b16 %v417, %v417
      %v437 = vunpack.c.l.b16 %v260
      %v438 = vunpack.c.l.b16 %v261
      %v439 = vunpack.c.l.b16 %v262
      %v440 = vunpack.c.l.b16 %v263
      %v441 = vunpack.c.l.b16 %v264
      %v442 = vunpack.c.l.b16 %v265
      %v443 = vunpack.c.l.b16 %v266
      %v444 = vunpack.c.l.b16 %v267
      %v445 = vunpack.c.l.b16 %v268
      %v446 = vunpack.c.l.b16 %v269
      %v447 = vunpack.c.l.b16 %v270
      %v448 = vunpack.c.l.b16 %v271
      %v449 = vunpack.c.l.b16 %v272
      %v450 = vunpack.c.l.b16 %v273
      %v451 = vunpack.c.l.b16 %v274
      %v452 = vunpack.c.l.b16 %v275
      %v453 = vpack.c.b16 %v438, %v437
      %v454 = vpack.c.b16 %v440, %v439
      %v455 = vpack.c.b16 %v442, %v441
      %v456 = vpack.c.b16 %v444, %v443
      %v457 = vpack.c.b16 %v446, %v445
      %v458 = vpack.c.b16 %v448, %v447
      %v459 = vpack.c.b16 %v450, %v449
      %v460 = vpack.c.b16 %v452, %v451
      %469 = vmatprep.subr.bf16.mxu0 0
      %470 = vmatpush1.bf16.msra.mxu0 %v453
      %471 = vmatprep.subr.bf16.mxu0 0
      %472 = vmatpush1.bf16.msra.mxu0 %v454
      %473 = vmatprep.subr.bf16.mxu0 0
      %474 = vmatpush1.bf16.msra.mxu0 %v455
      %475 = vmatprep.subr.bf16.mxu0 0
      %476 = vmatpush1.bf16.msra.mxu0 %v456
      %477 = vmatprep.subr.bf16.mxu0 0
      %478 = vmatpush1.bf16.msra.mxu0 %v457
      %479 = vmatprep.subr.bf16.mxu0 0
      %480 = vmatpush1.bf16.msra.mxu0 %v458
      %481 = vmatprep.subr.bf16.mxu0 0
      %482 = vmatpush1.bf16.msra.mxu0 %v459
      %483 = vmatprep.subr.bf16.mxu0 0
      %484 = vmatpush1.bf16.msra.mxu0 %v460
      %485 = vmatprep.subr.bf16.mxu0 0
      %486 = vmatpush1.bf16.msra.mxu0 0
      %487 = vmatprep.subr.bf16.mxu0 0
      %488 = vmatpush1.bf16.msra.mxu0 0
      %489 = vmatprep.subr.bf16.mxu0 0
      %490 = vmatpush1.bf16.msra.mxu0 0
      %491 = vmatprep.subr.bf16.mxu0 0
      %492 = vmatpush1.bf16.msra.mxu0 0
      %493 = vmatprep.subr.bf16.mxu0 0
      %494 = vmatpush1.bf16.msra.mxu0 0
      %495 = vmatprep.subr.bf16.mxu0 0
      %496 = vmatpush1.bf16.msra.mxu0 0
      %497 = vmatprep.subr.bf16.mxu0 0
      %498 = vmatpush1.bf16.msra.mxu0 0
      %499 = vmatprep.subr.bf16.mxu0 0
      %500 = vmatpush1.bf16.msra.mxu0 0
      %501 = vmatprep.mubr.bf16.mxu0 0
      %502 = vmatmul.mubr.bf16.gmra.mrb[0].mxu0 %v300
      %v503 = vpop.f32.mrb[0].mxu0
      %v504 = vadd.f32 %v403, %v503
      %v505 = vpop.f32.mrb[0].mxu0
      %v506 = vpop.f32.mrb[0].mxu0
      %v507 = vadd.f32 %v406, %v506
      %v508 = vpop.f32.mrb[0].mxu0
      %509 = vmatprep.mubr.bf16.mxu0 0
      %510 = vmatmul.mubr.bf16.gmra.mrb[0].mxu0 %v418
      %v511 = vpop.f32.mrb[0].mxu0
      %v512 = vadd.f32 %v411, %v511
      %v513 = vpop.f32.mrb[0].mxu0
      %v514 = vpop.f32.mrb[0].mxu0
      %v515 = vpop.f32.mrb[0].mxu0
      %516 = vdwg.mxu0
      %v517 = vld [vmem:[%s241] sm:$0xe]
      %s518 = scalar_lea.vmem %s1, 128
      %v519 = vld [vmem:[%s518] sm:$0xf]
      %v520 = vld [vmem:[%s518 + $0x4] sm:$0xf]
      %v521 = vld [vmem:[%s518 + $0x8] sm:$0xf]
      %v522 = vld [vmem:[%s518 + $0xc] sm:$0xf]
      %v523 = vld [vmem:[%s518 + $0x10] sm:$0xf]
      %v524 = vld [vmem:[%s518 + $0x14] sm:$0xf]
      %v525 = vld [vmem:[%s518 + $0x18] sm:$0xf]
      %v526 = vld [vmem:[%s518 + $0x1c] sm:$0xf]
      %v527 = vld [vmem:[%s518 + $0x20] sm:$0xf]
      %v528 = vld [vmem:[%s518 + $0x24] sm:$0xf]
      %v529 = vld [vmem:[%s518 + $0x28] sm:$0xf]
      %v530 = vld [vmem:[%s518 + $0x2c] sm:$0xf]
      %v531 = vld [vmem:[%s518 + $0x30] sm:$0xf]
      %v532 = vld [vmem:[%s518 + $0x34] sm:$0xf]
      %v533 = vld [vmem:[%s518 + $0x38] sm:$0xf]
      %v534 = vld [vmem:[%s518 + $0x3c] sm:$0xf]
      %v536 = vunpack.c.l.b16 %v517
      %v537 = vpack.c.b16 %v298, %v536
      %vm538 = vcmask 1046528
      %v539 = vrot.slane %v537, 1
      %v540 = vrot.slane %v301, 1
      %v541 = vsel %vm538, %v539, %v540
      %v560 = vunpack.c.l.b16 %v519
      %v561 = vunpack.c.l.b16 %v520
      %v562 = vunpack.c.l.b16 %v521
      %v563 = vunpack.c.l.b16 %v522
      %v564 = vunpack.c.l.b16 %v523
      %v565 = vunpack.c.l.b16 %v524
      %v566 = vunpack.c.l.b16 %v525
      %v567 = vunpack.c.l.b16 %v526
      %v568 = vunpack.c.l.b16 %v527
      %v569 = vunpack.c.l.b16 %v528
      %v570 = vunpack.c.l.b16 %v529
      %v571 = vunpack.c.l.b16 %v530
      %v572 = vunpack.c.l.b16 %v531
      %v573 = vunpack.c.l.b16 %v532
      %v574 = vunpack.c.l.b16 %v533
      %v575 = vunpack.c.l.b16 %v534
      %v576 = vpack.c.b16 %v561, %v560
      %v577 = vpack.c.b16 %v563, %v562
      %v578 = vpack.c.b16 %v565, %v564
      %v579 = vpack.c.b16 %v567, %v566
      %v580 = vpack.c.b16 %v569, %v568
      %v581 = vpack.c.b16 %v571, %v570
      %v582 = vpack.c.b16 %v573, %v572
      %v583 = vpack.c.b16 %v575, %v574
      %592 = vmatprep.subr.bf16.mxu0 0
      %593 = vmatpush1.bf16.msra.mxu0 %v576
      %594 = vmatprep.subr.bf16.mxu0 0
      %595 = vmatpush1.bf16.msra.mxu0 %v577
      %596 = vmatprep.subr.bf16.mxu0 0
      %597 = vmatpush1.bf16.msra.mxu0 %v578
      %598 = vmatprep.subr.bf16.mxu0 0
      %599 = vmatpush1.bf16.msra.mxu0 %v579
      %600 = vmatprep.subr.bf16.mxu0 0
      %601 = vmatpush1.bf16.msra.mxu0 %v580
      %602 = vmatprep.subr.bf16.mxu0 0
      %603 = vmatpush1.bf16.msra.mxu0 %v581
      %604 = vmatprep.subr.bf16.mxu0 0
      %605 = vmatpush1.bf16.msra.mxu0 %v582
      %606 = vmatprep.subr.bf16.mxu0 0
      %607 = vmatpush1.bf16.msra.mxu0 %v583
      %608 = vmatprep.subr.bf16.mxu0 0
      %609 = vmatpush1.bf16.msra.mxu0 0
      %610 = vmatprep.subr.bf16.mxu0 0
      %611 = vmatpush1.bf16.msra.mxu0 0
      %612 = vmatprep.subr.bf16.mxu0 0
      %613 = vmatpush1.bf16.msra.mxu0 0
      %614 = vmatprep.subr.bf16.mxu0 0
      %615 = vmatpush1.bf16.msra.mxu0 0
      %616 = vmatprep.subr.bf16.mxu0 0
      %617 = vmatpush1.bf16.msra.mxu0 0
      %618 = vmatprep.subr.bf16.mxu0 0
      %619 = vmatpush1.bf16.msra.mxu0 0
      %620 = vmatprep.subr.bf16.mxu0 0
      %621 = vmatpush1.bf16.msra.mxu0 0
      %622 = vmatprep.subr.bf16.mxu0 0
      %623 = vmatpush1.bf16.msra.mxu0 0
      %624 = vmatprep.mubr.bf16.mxu0 0
      %625 = vmatmul.mubr.bf16.gmra.mrb[0].mxu0 %v541
      %v626 = vpop.f32.mrb[0].mxu0
      %v627 = vadd.f32 0.0, %v626
      %v628 = vpop.f32.mrb[0].mxu0
      %v629 = vpop.f32.mrb[0].mxu0
      %v630 = vadd.f32 0.0, %v629
      %v631 = vpop.f32.mrb[0].mxu0
      %632 = vmatprep.mubr.bf16.mxu0 0
      %633 = vmatmul.mubr.bf16.gmra.mrb[0].mxu0 %v540
      %v634 = vpop.f32.mrb[0].mxu0
      %v635 = vadd.f32 0.0, %v634
      %v636 = vpop.f32.mrb[0].mxu0
      %v637 = vpop.f32.mrb[0].mxu0
      %v638 = vpop.f32.mrb[0].mxu0
      %639 = vdwg.mxu0
      %v640 = vadd.f32 %v504, %v627
      %v641 = vadd.f32 %v507, %v630
      %v642 = vadd.f32 %v512, %v635
      %v643 = vld [vmem:[%s2] sm:$0x1]
      %v645 = vlaneseq
      %v646 = vshrl.u32 %v645, 7
      %v647 = vsub.s32 0, %v646
      %v648 = vrot.slane %v643, %v647
      %v650 = vadd.f32 %v640, %v648
      %v651 = vadd.f32 %v641, %v648
      %v652 = vadd.f32 %v642, %v648
      %v653 = vpack.c.bf16 %v651, %v650
      %v654 = vpack.c.bf16 %v652, %v652
      %v657 = vunpack.c.l.b16 %v653
      %v658 = vunpack.c.h.b16 %v653
      %v659 = vunpack.c.l.b16 %v654
      %v660 = vpack.c.b16 %v657, %v657
      %v661 = vpack.c.b16 %v658, %v658
      %v662 = vpack.c.b16 %v659, %v659
      %666 = vst [vmem:[%s251] sm:$0xf] %v660
      %667 = vst [vmem:[%s251 + $0x4] sm:$0xf] %v661
      %668 = vst [vmem:[%s251 + $0x8] sm:$0x1] %v662
      %v669 = vld [vmem:[%s246] sm:$0xff]
      %v670 = vld [vmem:[%s246 + $0x8] sm:$0xff]
      %v671 = vld [vmem:[%s246 + $0x10] sm:$0x3]
      %673 = vset.pattern.permute.xlu0 0
      %674 = vperm.xlu0 %673, %v669
      %v675 = vpop.permute.xlu0 %674
      %678 = vset.pattern.permute.xlu0 0
      %679 = vperm.xlu0 %678, %v670
      %v680 = vpop.permute.xlu0 %679
      %683 = vset.pattern.permute.xlu0 0
      %684 = vperm.xlu0 %683, %v671
      %v685 = vpop.permute.xlu0 %684
      %v687 = vmul.f32 %v650, %v675
      %v688 = vmul.f32 %v651, %v680
      %v689 = vmul.f32 %v652, %v685
      %v690 = vadd.f32 %v687, %v688
      %vm691 = vcmask 1041408
      %v692 = vsel %vm691, %v689, 0.0
      %v693 = vadd.f32 %v690, %v692
      %v694 = vrot.slane %v693, 4
      %v695 = vadd.f32 %v693, %v694
      %v696 = vrot.slane %v695, 2
      %v697 = vadd.f32 %v695, %v696
      %v698 = vrot.slane %v697, 1
      %v699 = vadd.f32 %v697, %v698
      %700 = vst [vmem:[%s255] sm:$0x1] %v699
      %v701 = vmul.f32 %v687, %v650
      %v702 = vmul.f32 %v688, %v651
      %v703 = vmul.f32 %v689, %v652
      %v704 = vadd.f32 %v701, %v702
      %v705 = vsel %vm691, %v703, 0.0
      %v706 = vadd.f32 %v704, %v705
      %v707 = vrot.slane %v706, 4
      %v708 = vadd.f32 %v706, %v707
      %v709 = vrot.slane %v708, 2
      %v710 = vadd.f32 %v708, %v709
      %v711 = vrot.slane %v710, 1
      %v712 = vadd.f32 %v710, %v711
      %713 = vst [vmem:[%s255 + $0x1] sm:$0x1] %v712
      %p714 = scmp.lt.s32.totalorder %s17, 1
      %s715 = scalar_select %p714, %s17, 1
      %s716 = smul.addr %s715, 3
      %s717 = smul.addr %s716, 4
      %s718 = scalar_lea.vmem %s4, %s717
      %p719 = scmp.lt.s32.totalorder %s17, 1
      %s720 = scalar_select %p719, %s17, 1
      %s721 = smul.addr %s720, 2
      %s722 = scalar_lea.vmem %s5, %s721
      // Predicated region
      $region37: #{conv2d_res_block.3} parent=35 // pred_check
        %p723 = pneg %p129
      $region38: #{conv2d_res_block.3} parent=35 // pred_check_branch
        %725 = sbr.rel (%p723) target = $region40
      $region39: #{conv2d_res_block.3} parent=35 // pred_region
        _
      $region40: #{conv2d_res_block.3} parent=35 // pred_fallthru
        _
      // Predicated region
      $region41: #{conv2d_res_block.3} parent=35 // pred_check
        %p726 = pneg %p155
      $region42: #{conv2d_res_block.3} parent=35 // pred_check_branch
        %728 = sbr.rel (%p726) target = $region44
      $region43: #{conv2d_res_block.3} parent=35 // pred_region
        _
      $region44: #{conv2d_res_block.3} parent=35 // pred_fallthru
        _
    $region36: #{conv2d_res_block.3} parent=5 // pred_fallthru
      _
    %p729 = scmp.le.s32.totalorder 2, %s12
    // Predicated region
    $region45: #{conv2d_res_block.3} parent=5 // pred_check
      %p730 = pneg %p729
    $region46: #{conv2d_res_block.3} parent=5 // pred_check_branch
      %732 = sbr.rel (%p730) target = $region48
    $region47: #{conv2d_res_block.3} parent=5 // pred_region
      %s733 = ssub.s32 %s12, 2
      // Predicated region
      $region49: #{conv2d_res_block.3} parent=47 // pred_check
        %p734 = pneg %p135
      $region50: #{conv2d_res_block.3} parent=47 // pred_check_branch
        %736 = sbr.rel (%p734) target = $region52
      $region51: #{conv2d_res_block.3} parent=47 // pred_region
        %p737 = scmp.lt.s32.totalorder %s18, 1
        %s738 = scalar_select %p737, %s18, 1
        %s739 = smul.addr %s738, 3
        %s740 = smul.addr %s739, 4
        %s741 = scalar_lea.vmem %s4, %s740
      $region52: #{conv2d_res_block.3} parent=47 // pred_fallthru
        _
      // Predicated region
      $region53: #{conv2d_res_block.3} parent=47 // pred_check
        %p742 = pneg %p161
      $region54: #{conv2d_res_block.3} parent=47 // pred_check_branch
        %744 = sbr.rel (%p742) target = $region56
      $region55: #{conv2d_res_block.3} parent=47 // pred_region
        %p745 = scmp.lt.s32.totalorder %s18, 1
        %s746 = scalar_select %p745, %s18, 1
        %s747 = smul.addr %s746, 2
        %s748 = scalar_lea.vmem %s5, %s747
      $region56: #{conv2d_res_block.3} parent=47 // pred_fallthru
        _
    $region48: #{conv2d_res_block.3} parent=5 // pred_fallthru
      _
  $region6: #{conv2d_res_block.3} parent=0 // loop_footer
    %s16 = sadd.s32 1, %s12
  $region7: #{conv2d_res_block.3} parent=0 // loop_footer_branch
    %11 = sbr.rel target = $region3
  $region8: #{conv2d_res_block.3} parent=0 // loop_exit
    _

// kernel: squeeze.40
$region0: #{squeeze.40}
  %s0 = inlined_call_operand.vmem [shape: f32[128], index: 0, kind: input, shape index: {}]
  %s1 = inlined_call_operand.vmem [shape: f32[16,8], index: 1, kind: output, shape index: {}]
  $region1: #{squeeze.40} parent=0
    #allocation0 [shape = 'u8[4096]{0}', space=vmem, size = 0x1000, scoped, tag = 'scoped mem for input reshape']
    %s3 = sshllo.u32 0, 1
    %v4 = vld [vmem:[%s0] sm:%s3]
    %5 = vst [vmem:[#allocation0] sm:%s3] %v4
    %v6 = vld [vmem:[#allocation0] sm:$0x1]
    %vm7 = vcmask 64512
    %8 = vst.msk [vmem:[%s1] sm:$0x1] %vm7, %v6
    %v9 = vld [vmem:[#allocation0] sm:$0x1]
    %10 = vrot.lane.b32.xlu0 %v9, 120
    %v11 = vpop.permute.xlu0 %10
    %vm12 = vcmask 64512
    %s13 = scalar_lea.vmem %s1, 1
    %14 = vst.msk [vmem:[%s13] sm:$0x1] %vm12, %v11
    %v15 = vld [vmem:[#allocation0] sm:$0x1]
    %16 = vrot.lane.b32.xlu0 %v15, 112
    %v17 = vpop.permute.xlu0 %16
    %vm18 = vcmask 64512
    %s19 = scalar_lea.vmem %s1, 2
    %20 = vst.msk [vmem:[%s19] sm:$0x1] %vm18, %v17
    %v21 = vld [vmem:[#allocation0] sm:$0x1]
    %22 = vrot.lane.b32.xlu0 %v21, 104
    %v23 = vpop.permute.xlu0 %22
    %vm24 = vcmask 64512
    %s25 = scalar_lea.vmem %s1, 3
    %26 = vst.msk [vmem:[%s25] sm:$0x1] %vm24, %v23
    %v27 = vld [vmem:[#allocation0] sm:$0x1]
    %28 = vrot.lane.b32.xlu0 %v27, 96
    %v29 = vpop.permute.xlu0 %28
    %vm30 = vcmask 64512
    %s31 = scalar_lea.vmem %s1, 4
    %32 = vst.msk [vmem:[%s31] sm:$0x1] %vm30, %v29
    %v33 = vld [vmem:[#allocation0] sm:$0x1]
    %34 = vrot.lane.b32.xlu0 %v33, 88
    %v35 = vpop.permute.xlu0 %34
    %vm36 = vcmask 64512
    %s37 = scalar_lea.vmem %s1, 5
    %38 = vst.msk [vmem:[%s37] sm:$0x1] %vm36, %v35
    %v39 = vld [vmem:[#allocation0] sm:$0x1]
    %40 = vrot.lane.b32.xlu0 %v39, 80
    %v41 = vpop.permute.xlu0 %40
    %vm42 = vcmask 64512
    %s43 = scalar_lea.vmem %s1, 6
    %44 = vst.msk [vmem:[%s43] sm:$0x1] %vm42, %v41
    %v45 = vld [vmem:[#allocation0] sm:$0x1]
    %46 = vrot.lane.b32.xlu0 %v45, 72
    %v47 = vpop.permute.xlu0 %46
    %vm48 = vcmask 64512
    %s49 = scalar_lea.vmem %s1, 7
    %50 = vst.msk [vmem:[%s49] sm:$0x1] %vm48, %v47
    %v51 = vld [vmem:[#allocation0] sm:$0x1]
    %52 = vrot.lane.b32.xlu0 %v51, 64
    %v53 = vpop.permute.xlu0 %52
    %vm54 = vcmask 64512
    %s55 = scalar_lea.vmem %s1, 8
    %56 = vst.msk [vmem:[%s55] sm:$0x1] %vm54, %v53
    %v57 = vld [vmem:[#allocation0] sm:$0x1]
    %58 = vrot.lane.b32.xlu0 %v57, 56
    %v59 = vpop.permute.xlu0 %58
    %vm60 = vcmask 64512
    %s61 = scalar_lea.vmem %s1, 9
    %62 = vst.msk [vmem:[%s61] sm:$0x1] %vm60, %v59
    %v63 = vld [vmem:[#allocation0] sm:$0x1]
    %64 = vrot.lane.b32.xlu0 %v63, 48
    %v65 = vpop.permute.xlu0 %64
    %vm66 = vcmask 64512
    %s67 = scalar_lea.vmem %s1, 10
    %68 = vst.msk [vmem:[%s67] sm:$0x1] %vm66, %v65
    %v69 = vld [vmem:[#allocation0] sm:$0x1]
    %70 = vrot.lane.b32.xlu0 %v69, 40
    %v71 = vpop.permute.xlu0 %70
    %vm72 = vcmask 64512
    %s73 = scalar_lea.vmem %s1, 11
    %74 = vst.msk [vmem:[%s73] sm:$0x1] %vm72, %v71
    %v75 = vld [vmem:[#allocation0] sm:$0x1]
    %76 = vrot.lane.b32.xlu0 %v75, 32
    %v77 = vpop.permute.xlu0 %76
    %vm78 = vcmask 64512
    %s79 = scalar_lea.vmem %s1, 12
    %80 = vst.msk [vmem:[%s79] sm:$0x1] %vm78, %v77
    %v81 = vld [vmem:[#allocation0] sm:$0x1]
    %82 = vrot.lane.b32.xlu0 %v81, 24
    %v83 = vpop.permute.xlu0 %82
    %vm84 = vcmask 64512
    %s85 = scalar_lea.vmem %s1, 13
    %86 = vst.msk [vmem:[%s85] sm:$0x1] %vm84, %v83
    %v87 = vld [vmem:[#allocation0] sm:$0x1]
    %88 = vrot.lane.b32.xlu0 %v87, 16
    %v89 = vpop.permute.xlu0 %88
    %vm90 = vcmask 64512
    %s91 = scalar_lea.vmem %s1, 14
    %92 = vst.msk [vmem:[%s91] sm:$0x1] %vm90, %v89
    %v93 = vld [vmem:[#allocation0] sm:$0x1]
    %94 = vrot.lane.b32.xlu0 %v93, 8
    %v95 = vpop.permute.xlu0 %94
    %vm96 = vcmask 64512
    %s97 = scalar_lea.vmem %s1, 15
    %98 = vst.msk [vmem:[%s97] sm:$0x1] %vm96, %v95

// kernel: conv2d_res_block.5
$region0: #{conv2d_res_block.5}
  #allocation0 [shape = 'u32[]', space=smem, size = 0x4, offset = 0x4, fixed_abs, tag = 'smem constant byte address 0x4 - core index']
  #allocation1 [shape = 'u32[144,128]{1,0:T(1,128)}', space=vmem, size = 0x12000, scoped, tag = 'internal scratch']
  %s0 = inlined_call_operand.vmem [shape: bf16[2,18,128], index: 0, kind: input, shape index: {}]
  %s1 = inlined_call_operand.vmem [shape: f32[1,128], index: 1, kind: input, shape index: {}]
  %s2 = inlined_call_operand.vmem [shape: f32[1,128], index: 2, kind: input, shape index: {}]
  %s3 = inlined_call_operand.vmem [shape: f32[2,16,128], index: 3, kind: output, shape index: {}]
  %s4 = sld [smem:[#allocation0]]
  $region45: #{conv2d_res_block.5} parent=0
    _
  %s6 = ssub.s32 1, %s4
  %s7 = scalar_select 0, %s6, %s4
  loop: start=0, step=1, limit=4
  $region2: #{conv2d_res_block.5} parent=0 // loop_pre_header
    _
  $region3: #{conv2d_res_block.5} parent=0 // loop_header
    %s9 = sphi 0, %s13
    %p10 = scmp.ge.s32.totalorder %s9, 4
    %s19 = sphi 0, %s21
    %s22 = sphi 0, %s19
    %s23 = sphi 0, %s22
    %s39 = sphi 0, %s23
    %s43 = sphi 0, %s43
    %s45 = sphi 0, %s43
    %s46 = sphi 0, %s45
    %s60 = sphi 0, %s46
    %s64 = sphi 0, %s64
    %s66 = sphi 0, %s64
    %s67 = sphi 0, %s66
    %s81 = sphi 0, %s67
    %s87 = sphi 0, %s89
    %s90 = sphi 0, %s87
    %s91 = sphi 0, %s90
    %s107 = sphi 0, %s91
  $region4: #{conv2d_res_block.5} parent=0 // loop_header_branch
    %12 = sbr.rel (%p10) target = $region8
  $region5: #{conv2d_res_block.5} parent=0 // loop_body
    %s14 = ssub.s32 %s9, 1
    %s15 = ssub.s32 %s9, 2
    %s16 = sadd.s32 %s9, 1
    %s17 = ssub.s32 %s9, %s16
    %p18 = scmp.eq.s32.totalorder %s17, 0
    %s20 = sadd.s32 %s19, 1
    %s21 = scalar_select %p18, %s19, %s20
    %p24 = pneg %p18
    %p25 = scmp.eq.s32.totalorder %s9, 1
    %p26 = por %p24, %p25
    %p27 = scmp.ne.s32.totalorder %s19, %s22
    %p28 = scmp.eq.s32.totalorder %s9, 0
    %p29 = por %p27, %p28
    %p30 = scmp.ne.s32.totalorder %s19, %s22
    %p31 = scmp.eq.s32.totalorder %s14, 1
    %p32 = por %p30, %p31
    %p33 = scmp.ne.s32.totalorder %s22, %s23
    %p34 = scmp.eq.s32.totalorder %s14, 0
    %p35 = por %p33, %p34
    %p36 = scmp.ne.s32.totalorder %s22, %s23
    %p37 = scmp.eq.s32.totalorder %s15, 1
    %p38 = por %p36, %p37
    %p40 = scmp.ne.s32.totalorder %s23, %s39
    %p41 = scmp.eq.s32.totalorder %s15, 0
    %p42 = por %p40, %p41
    %s44 = sadd.s32 %s43, 1
    %p47 = scmp.eq.s32.totalorder %s9, 1
    %p48 = scmp.ne.s32.totalorder %s43, %s45
    %p49 = scmp.eq.s32.totalorder %s9, 0
    %p50 = por %p48, %p49
    %p51 = scmp.ne.s32.totalorder %s43, %s45
    %p52 = scmp.eq.s32.totalorder %s14, 1
    %p53 = por %p51, %p52
    %p54 = scmp.ne.s32.totalorder %s45, %s46
    %p55 = scmp.eq.s32.totalorder %s14, 0
    %p56 = por %p54, %p55
    %p57 = scmp.ne.s32.totalorder %s45, %s46
    %p58 = scmp.eq.s32.totalorder %s15, 1
    %p59 = por %p57, %p58
    %p61 = scmp.ne.s32.totalorder %s46, %s60
    %p62 = scmp.eq.s32.totalorder %s15, 0
    %p63 = por %p61, %p62
    %s65 = sadd.s32 %s64, 1
    %p68 = scmp.eq.s32.totalorder %s9, 1
    %p69 = scmp.ne.s32.totalorder %s64, %s66
    %p70 = scmp.eq.s32.totalorder %s9, 0
    %p71 = por %p69, %p70
    %p72 = scmp.ne.s32.totalorder %s64, %s66
    %p73 = scmp.eq.s32.totalorder %s14, 1
    %p74 = por %p72, %p73
    %p75 = scmp.ne.s32.totalorder %s66, %s67
    %p76 = scmp.eq.s32.totalorder %s14, 0
    %p77 = por %p75, %p76
    %p78 = scmp.ne.s32.totalorder %s66, %s67
    %p79 = scmp.eq.s32.totalorder %s15, 1
    %p80 = por %p78, %p79
    %p82 = scmp.ne.s32.totalorder %s67, %s81
    %p83 = scmp.eq.s32.totalorder %s15, 0
    %p84 = por %p82, %p83
    %s85 = ssub.s32 %s9, %s16
    %p86 = scmp.eq.s32.totalorder %s85, 0
    %s88 = sadd.s32 %s87, 1
    %s89 = scalar_select %p86, %s87, %s88
    %p92 = pneg %p86
    %p93 = scmp.eq.s32.totalorder %s9, 1
    %p94 = por %p92, %p93
    %p95 = scmp.ne.s32.totalorder %s87, %s90
    %p96 = scmp.eq.s32.totalorder %s9, 0
    %p97 = por %p95, %p96
    %p98 = scmp.ne.s32.totalorder %s87, %s90
    %p99 = scmp.eq.s32.totalorder %s14, 1
    %p100 = por %p98, %p99
    %p101 = scmp.ne.s32.totalorder %s90, %s91
    %p102 = scmp.eq.s32.totalorder %s14, 0
    %p103 = por %p101, %p102
    %p104 = scmp.ne.s32.totalorder %s90, %s91
    %p105 = scmp.eq.s32.totalorder %s15, 1
    %p106 = por %p104, %p105
    %p108 = scmp.ne.s32.totalorder %s91, %s107
    %p109 = scmp.eq.s32.totalorder %s15, 0
    %p110 = por %p108, %p109
    %p111 = scmp.le.s32.totalorder 1, %s9
    %p112 = scmp.lt.s32.totalorder %s9, 3
    %p113 = pnand %p111, %p112
    %p114 = pneg %p113
    // Predicated region
    $region9: #{conv2d_res_block.5} parent=5 // pred_check
      _
    $region10: #{conv2d_res_block.5} parent=5 // pred_check_branch
      %116 = sbr.rel (%p113) target = $region12
    $region11: #{conv2d_res_block.5} parent=5 // pred_region
      %s117 = ssub.s32 %s9, 1
      // Predicated region
      $region13: #{conv2d_res_block.5} parent=11 // pred_check
        %p118 = pneg %p56
      $region14: #{conv2d_res_block.5} parent=11 // pred_check_branch
        %120 = sbr.rel (%p118) target = $region16
      $region15: #{conv2d_res_block.5} parent=11 // pred_region
        _
      $region16: #{conv2d_res_block.5} parent=11 // pred_fallthru
        _
      // Predicated region
      $region17: #{conv2d_res_block.5} parent=11 // pred_check
        %p121 = pneg %p77
      $region18: #{conv2d_res_block.5} parent=11 // pred_check_branch
        %123 = sbr.rel (%p121) target = $region20
      $region19: #{conv2d_res_block.5} parent=11 // pred_region
        _
      $region20: #{conv2d_res_block.5} parent=11 // pred_fallthru
        _
    $region12: #{conv2d_res_block.5} parent=5 // pred_fallthru
      _
    %p124 = scmp.lt.s32.totalorder %s9, 2
    // Predicated region
    $region21: #{conv2d_res_block.5} parent=5 // pred_check
      %p125 = pneg %p124
    $region22: #{conv2d_res_block.5} parent=5 // pred_check_branch
      %127 = sbr.rel (%p125) target = $region24
    $region23: #{conv2d_res_block.5} parent=5 // pred_region
      // Predicated region
      $region25: #{conv2d_res_block.5} parent=23 // pred_check
        %p128 = pneg %p29
      $region26: #{conv2d_res_block.5} parent=23 // pred_check_branch
        %130 = sbr.rel (%p128) target = $region28
      $region27: #{conv2d_res_block.5} parent=23 // pred_region
        %p131 = scmp.lt.s32.totalorder %s9, 1
        %s132 = scalar_select %p131, %s9, 1
        %s133 = smul.addr %s132, 3
        %s134 = smul.addr %s133, 4
        %s135 = scalar_lea.vmem %s0, %s134
      $region28: #{conv2d_res_block.5} parent=23 // pred_fallthru
        _
    $region24: #{conv2d_res_block.5} parent=5 // pred_fallthru
      _
    %p136 = scmp.le.s32.totalorder 1, %s9
    %p137 = scmp.lt.s32.totalorder %s9, 3
    %p138 = pnand %p136, %p137
    %p139 = pneg %p138
    // Predicated region
    $region29: #{conv2d_res_block.5} parent=5 // pred_check
      _
    $region30: #{conv2d_res_block.5} parent=5 // pred_check_branch
      %141 = sbr.rel (%p138) target = $region32
    $region31: #{conv2d_res_block.5} parent=5 // pred_region
      %s142 = ssub.s32 %s9, 1
      %p143 = scmp.lt.s32.totalorder %s14, 1
      %s144 = scalar_select %p143, %s14, 1
      %s145 = smul.addr %s144, 3
      %s146 = smul.addr %s145, 4
      %s147 = scalar_lea.vmem %s0, %s146
      %p148 = pneg %p35
      %p149 = pneg %p32
      %p150 = pneg %p56
      %p151 = pneg %p53
      %p152 = pneg %p77
      %p153 = pneg %p74
      %p154 = pneg %p103
      %p155 = pneg %p100
      %p156 = scmp.lt.s32.totalorder %s14, 1
      %s157 = scalar_select %p156, %s14, 1
      %s158 = smul.addr %s157, 2
      %s159 = smul.addr %s158, 8
      %s160 = scalar_lea.vmem %s3, %s159
      %p161 = scmp.lt.s32.totalorder %s14, 1
      %s162 = scalar_select %p161, %s14, 1
      %s163 = smul.addr %s162, 3
      %s164 = smul.addr %s163, 4
      %s165 = scalar_lea.vmem %s0, %s164
      %p166 = scmp.lt.s32.totalorder %s14, 1
      %s167 = scalar_select %p166, %s14, 1
      %s168 = smul.addr %s167, 2
      %s169 = smul.addr %s168, 8
      %s170 = scalar_lea.vmem %s3, %s169
      %v171 = vld [vmem:[%s1] sm:$0x1]
      %v172 = vld [vmem:[%s2] sm:$0x1]
      %v173 = vld [vmem:[%s165] sm:$0xf]
      %v174 = vld [vmem:[%s165 + $0x4] sm:$0xf]
      %v175 = vld [vmem:[%s165 + $0x8] sm:$0x1]
      %v176 = vunpack.c.l.bf16 %v173
      %v177 = vunpack.c.l.bf16 %v174
      %v178 = vunpack.c.l.bf16 %v175
      %v180 = vlaneseq
      %v181 = vshrl.u32 %v180, 7
      %v182 = vsub.s32 0, %v181
      %v183 = vrot.slane %v171, %v182
      %v185 = vmul.f32 %v176, %v183
      %v186 = vmul.f32 %v177, %v183
      %v187 = vmul.f32 %v178, %v183
      %v189 = vlaneseq
      %v190 = vshrl.u32 %v189, 7
      %v191 = vsub.s32 0, %v190
      %v192 = vrot.slane %v172, %v191
      %v194 = vadd.f32 %v185, %v192
      %v195 = vadd.f32 %v186, %v192
      %v196 = vadd.f32 %v187, %v192
      %v197 = vmul.f32 %v194, 0.5
      %v198 = vmul.f32 %v195, 0.5
      %v199 = vmul.f32 %v196, 0.5
      %v200 = vmul.f32 %v194, 0.70710677
      %v201 = vmul.f32 %v195, 0.70710677
      %v202 = vmul.f32 %v196, 0.70710677
      %vm203 = vcmp.lt.f32.partialorder %v200, 0.0
      %vm204 = vcmp.lt.f32.partialorder %v201, 0.0
      %vm205 = vcmp.lt.f32.partialorder %v202, 0.0
      %v206 = vsel %vm203, -1.0, 1.0
      %v207 = vsel %vm204, -1.0, 1.0
      %v208 = vsel %vm205, -1.0, 1.0
      %v209 = vand.u32 2147483647, %v200
      %v210 = vand.u32 2147483647, %v201
      %v211 = vand.u32 2147483647, %v202
      %v212 = vmul.f32 %v209, 0.3275911
      %v213 = vmul.f32 %v210, 0.3275911
      %v214 = vmul.f32 %v211, 0.3275911
      %v215 = vadd.f32 %v212, 1.0
      %v216 = vadd.f32 %v213, 1.0
      %v217 = vadd.f32 %v214, 1.0
      %v218 = vrcp.pop %v215
      %v219 = vmul.f32 1.0, %v218
      %v220 = vrcp.pop %v216
      %v221 = vmul.f32 1.0, %v220
      %v222 = vrcp.pop %v217
      %v223 = vmul.f32 1.0, %v222
      %v224 = vmul.f32 %v219, 1.0614054
      %v225 = vmul.f32 %v221, 1.0614054
      %v226 = vmul.f32 %v223, 1.0614054
      %v227 = vadd.f32 %v224, -1.4531521
      %v228 = vadd.f32 %v225, -1.4531521
      %v229 = vadd.f32 %v226, -1.4531521
      %v230 = vmul.f32 %v227, %v219
      %v231 = vmul.f32 %v228, %v221
      %v232 = vmul.f32 %v229, %v223
      %v233 = vadd.f32 %v230, 1.4214138
      %v234 = vadd.f32 %v231, 1.4214138
      %v235 = vadd.f32 %v232, 1.4214138
      %v236 = vmul.f32 %v233, %v219
      %v237 = vmul.f32 %v234, %v221
      %v238 = vmul.f32 %v235, %v223
      %v239 = vadd.f32 %v236, -0.28449672
      %v240 = vadd.f32 %v237, -0.28449672
      %v241 = vadd.f32 %v238, -0.28449672
      %v242 = vmul.f32 %v239, %v219
      %v243 = vmul.f32 %v240, %v221
      %v244 = vmul.f32 %v241, %v223
      %v245 = vadd.f32 %v242, 0.2548296
      %v246 = vadd.f32 %v243, 0.2548296
      %v247 = vadd.f32 %v244, 0.2548296
      %v248 = vmul.f32 %v245, %v219
      %v249 = vmul.f32 %v246, %v221
      %v250 = vmul.f32 %v247, %v223
      %v251 = vsub.f32 0.0, %v209
      %v252 = vsub.f32 0.0, %v210
      %v253 = vsub.f32 0.0, %v211
      %v254 = vmul.f32 %v251, %v209
      %v255 = vmul.f32 %v252, %v210
      %v256 = vmul.f32 %v253, %v211
      %v257 = vmul.f32 %v254, 1.442695
      %v258 = vpow.pop %v257
      %v259 = vmul.f32 %v255, 1.442695
      %v260 = vpow.pop %v259
      %v261 = vmul.f32 %v256, 1.442695
      %v262 = vpow.pop %v261
      %v263 = vmul.f32 %v248, %v258
      %v264 = vmul.f32 %v249, %v260
      %v265 = vmul.f32 %v250, %v262
      %v266 = vsub.f32 1.0, %v263
      %v267 = vsub.f32 1.0, %v264
      %v268 = vsub.f32 1.0, %v265
      %v269 = vmul.f32 %v206, %v266
      %v270 = vmul.f32 %v207, %v267
      %v271 = vmul.f32 %v208, %v268
      %v272 = vadd.f32 %v269, 1.0
      %v273 = vadd.f32 %v270, 1.0
      %v274 = vadd.f32 %v271, 1.0
      %v275 = vmul.f32 %v197, %v272
      %v276 = vmul.f32 %v198, %v273
      %v277 = vmul.f32 %v199, %v274
      %278 = vst [vmem:[%s170 - $0x1] sm:$0xfe] %v275
      %279 = vst [vmem:[%s170 + $0x7] sm:$0xff] %v276
      %280 = vst [vmem:[%s170 + $0xf] sm:$0x1] %v277
      %p281 = scmp.lt.s32.totalorder %s14, 1
      %s282 = scalar_select %p281, %s14, 1
      %s283 = smul.addr %s282, 2
      %s284 = smul.addr %s283, 8
      %s285 = scalar_lea.vmem %s3, %s284
      // Predicated region
      $region33: #{conv2d_res_block.5} parent=31 // pred_check
        %p286 = pneg %p100
      $region34: #{conv2d_res_block.5} parent=31 // pred_check_branch
        %288 = sbr.rel (%p286) target = $region36
      $region35: #{conv2d_res_block.5} parent=31 // pred_region
        _
      $region36: #{conv2d_res_block.5} parent=31 // pred_fallthru
        _
    $region32: #{conv2d_res_block.5} parent=5 // pred_fallthru
      _
    %p289 = scmp.le.s32.totalorder 2, %s9
    // Predicated region
    $region37: #{conv2d_res_block.5} parent=5 // pred_check
      %p290 = pneg %p289
    $region38: #{conv2d_res_block.5} parent=5 // pred_check_branch
      %292 = sbr.rel (%p290) target = $region40
    $region39: #{conv2d_res_block.5} parent=5 // pred_region
      %s293 = ssub.s32 %s9, 2
      // Predicated region
      $region41: #{conv2d_res_block.5} parent=39 // pred_check
        %p294 = pneg %p106
      $region42: #{conv2d_res_block.5} parent=39 // pred_check_branch
        %296 = sbr.rel (%p294) target = $region44
      $region43: #{conv2d_res_block.5} parent=39 // pred_region
        %p297 = scmp.lt.s32.totalorder %s15, 1
        %s298 = scalar_select %p297, %s15, 1
        %s299 = smul.addr %s298, 2
        %s300 = smul.addr %s299, 8
        %s301 = scalar_lea.vmem %s3, %s300
      $region44: #{conv2d_res_block.5} parent=39 // pred_fallthru
        _
    $region40: #{conv2d_res_block.5} parent=5 // pred_fallthru
      _
  $region6: #{conv2d_res_block.5} parent=0 // loop_footer
    %s13 = sadd.s32 1, %s9
  $region7: #{conv2d_res_block.5} parent=0 // loop_footer_branch
    %8 = sbr.rel target = $region3
  $region8: #{conv2d_res_block.5} parent=0 // loop_exit
    _

// kernel: conv2d_res_block.4
$region0: #{conv2d_res_block.4}
  #allocation0 [shape = 'u32[]', space=smem, size = 0x4, offset = 0x4, fixed_abs, tag = 'smem constant byte address 0x4 - core index']
  #allocation1 [shape = 'u32[144,128]{1,0:T(1,128)}', space=vmem, size = 0x12000, scoped, tag = 'internal scratch']
  #allocation2 [shape = 'f32[34,128]{1,0:T(8,128)}', space=vmem, size = 0x5000, scoped, tag = 'scratch operand']
  %s0 = inlined_call_operand.vmem [shape: bf16[2,18,128], index: 0, kind: input, shape index: {}]
  %s1 = inlined_call_operand.vmem [shape: bf16[2,20,128], index: 1, kind: input, shape index: {}]
  %s2 = inlined_call_operand.vmem [shape: f32[2,18,1], index: 2, kind: input, shape index: {}]
  %s3 = inlined_call_operand.vmem [shape: f32[1,128], index: 3, kind: input, shape index: {}]
  %s4 = inlined_call_operand.vmem [shape: f32[1,128], index: 4, kind: input, shape index: {}]
  %s5 = inlined_call_operand.vmem [shape: bf16[2,128,128], index: 5, kind: input, shape index: {}]
  %s6 = inlined_call_operand.vmem [shape: bf16[256,128], index: 6, kind: input, shape index: {}]
  %s7 = inlined_call_operand.vmem [shape: f32[1,128], index: 7, kind: input, shape index: {}]
  %s8 = inlined_call_operand.vmem [shape: bf16[2,18,128], index: 8, kind: output, shape index: {0}]
  %s9 = inlined_call_operand.vmem [shape: f32[2,2,128], index: 9, kind: output, shape index: {1}]
  %10 = xla_tuple %s8, %s9
  %s11 = sld [smem:[#allocation0]]
  $region73: #{conv2d_res_block.4} parent=0
    _
  %s13 = ssub.s32 1, %s11
  %s14 = scalar_select 0, %s13, %s11
  loop: start=0, step=1, limit=4
  $region2: #{conv2d_res_block.4} parent=0 // loop_pre_header
    _
  $region3: #{conv2d_res_block.4} parent=0 // loop_header
    %s16 = sphi 0, %s20
    %p17 = scmp.ge.s32.totalorder %s16, 4
    %s26 = sphi 0, %s28
    %s29 = sphi 0, %s26
    %s30 = sphi 0, %s29
    %s46 = sphi 0, %s30
    %s52 = sphi 0, %s54
    %s55 = sphi 0, %s52
    %s56 = sphi 0, %s55
    %s72 = sphi 0, %s56
    %s78 = sphi 0, %s80
    %s81 = sphi 0, %s78
    %s82 = sphi 0, %s81
    %s98 = sphi 0, %s82
    %s102 = sphi 0, %s102
    %s104 = sphi 0, %s102
    %s105 = sphi 0, %s104
    %s119 = sphi 0, %s105
    %s123 = sphi 0, %s123
    %s125 = sphi 0, %s123
    %s126 = sphi 0, %s125
    %s140 = sphi 0, %s126
    %s144 = sphi 0, %s144
    %s146 = sphi 0, %s144
    %s147 = sphi 0, %s146
    %s161 = sphi 0, %s147
    %s165 = sphi 0, %s165
    %s167 = sphi 0, %s165
    %s168 = sphi 0, %s167
    %s182 = sphi 0, %s168
    %s186 = sphi 0, %s186
    %s188 = sphi 0, %s186
    %s189 = sphi 0, %s188
    %s203 = sphi 0, %s189
    %s209 = sphi 0, %s211
    %s212 = sphi 0, %s209
    %s213 = sphi 0, %s212
    %s229 = sphi 0, %s213
    %s235 = sphi 0, %s237
    %s238 = sphi 0, %s235
    %s239 = sphi 0, %s238
    %s255 = sphi 0, %s239
  $region4: #{conv2d_res_block.4} parent=0 // loop_header_branch
    %19 = sbr.rel (%p17) target = $region8
  $region5: #{conv2d_res_block.4} parent=0 // loop_body
    %s21 = ssub.s32 %s16, 1
    %s22 = ssub.s32 %s16, 2
    %s23 = sadd.s32 %s16, 1
    %s24 = ssub.s32 %s16, %s23
    %p25 = scmp.eq.s32.totalorder %s24, 0
    %s27 = sadd.s32 %s26, 1
    %s28 = scalar_select %p25, %s26, %s27
    %p31 = pneg %p25
    %p32 = scmp.eq.s32.totalorder %s16, 1
    %p33 = por %p31, %p32
    %p34 = scmp.ne.s32.totalorder %s26, %s29
    %p35 = scmp.eq.s32.totalorder %s16, 0
    %p36 = por %p34, %p35
    %p37 = scmp.ne.s32.totalorder %s26, %s29
    %p38 = scmp.eq.s32.totalorder %s21, 1
    %p39 = por %p37, %p38
    %p40 = scmp.ne.s32.totalorder %s29, %s30
    %p41 = scmp.eq.s32.totalorder %s21, 0
    %p42 = por %p40, %p41
    %p43 = scmp.ne.s32.totalorder %s29, %s30
    %p44 = scmp.eq.s32.totalorder %s22, 1
    %p45 = por %p43, %p44
    %p47 = scmp.ne.s32.totalorder %s30, %s46
    %p48 = scmp.eq.s32.totalorder %s22, 0
    %p49 = por %p47, %p48
    %s50 = ssub.s32 %s16, %s23
    %p51 = scmp.eq.s32.totalorder %s50, 0
    %s53 = sadd.s32 %s52, 1
    %s54 = scalar_select %p51, %s52, %s53
    %p57 = pneg %p51
    %p58 = scmp.eq.s32.totalorder %s16, 1
    %p59 = por %p57, %p58
    %p60 = scmp.ne.s32.totalorder %s52, %s55
    %p61 = scmp.eq.s32.totalorder %s16, 0
    %p62 = por %p60, %p61
    %p63 = scmp.ne.s32.totalorder %s52, %s55
    %p64 = scmp.eq.s32.totalorder %s21, 1
    %p65 = por %p63, %p64
    %p66 = scmp.ne.s32.totalorder %s55, %s56
    %p67 = scmp.eq.s32.totalorder %s21, 0
    %p68 = por %p66, %p67
    %p69 = scmp.ne.s32.totalorder %s55, %s56
    %p70 = scmp.eq.s32.totalorder %s22, 1
    %p71 = por %p69, %p70
    %p73 = scmp.ne.s32.totalorder %s56, %s72
    %p74 = scmp.eq.s32.totalorder %s22, 0
    %p75 = por %p73, %p74
    %s76 = ssub.s32 %s16, %s23
    %p77 = scmp.eq.s32.totalorder %s76, 0
    %s79 = sadd.s32 %s78, 1
    %s80 = scalar_select %p77, %s78, %s79
    %p83 = pneg %p77
    %p84 = scmp.eq.s32.totalorder %s16, 1
    %p85 = por %p83, %p84
    %p86 = scmp.ne.s32.totalorder %s78, %s81
    %p87 = scmp.eq.s32.totalorder %s16, 0
    %p88 = por %p86, %p87
    %p89 = scmp.ne.s32.totalorder %s78, %s81
    %p90 = scmp.eq.s32.totalorder %s21, 1
    %p91 = por %p89, %p90
    %p92 = scmp.ne.s32.totalorder %s81, %s82
    %p93 = scmp.eq.s32.totalorder %s21, 0
    %p94 = por %p92, %p93
    %p95 = scmp.ne.s32.totalorder %s81, %s82
    %p96 = scmp.eq.s32.totalorder %s22, 1
    %p97 = por %p95, %p96
    %p99 = scmp.ne.s32.totalorder %s82, %s98
    %p100 = scmp.eq.s32.totalorder %s22, 0
    %p101 = por %p99, %p100
    %s103 = sadd.s32 %s102, 1
    %p106 = scmp.eq.s32.totalorder %s16, 1
    %p107 = scmp.ne.s32.totalorder %s102, %s104
    %p108 = scmp.eq.s32.totalorder %s16, 0
    %p109 = por %p107, %p108
    %p110 = scmp.ne.s32.totalorder %s102, %s104
    %p111 = scmp.eq.s32.totalorder %s21, 1
    %p112 = por %p110, %p111
    %p113 = scmp.ne.s32.totalorder %s104, %s105
    %p114 = scmp.eq.s32.totalorder %s21, 0
    %p115 = por %p113, %p114
    %p116 = scmp.ne.s32.totalorder %s104, %s105
    %p117 = scmp.eq.s32.totalorder %s22, 1
    %p118 = por %p116, %p117
    %p120 = scmp.ne.s32.totalorder %s105, %s119
    %p121 = scmp.eq.s32.totalorder %s22, 0
    %p122 = por %p120, %p121
    %s124 = sadd.s32 %s123, 1
    %p127 = scmp.eq.s32.totalorder %s16, 1
    %p128 = scmp.ne.s32.totalorder %s123, %s125
    %p129 = scmp.eq.s32.totalorder %s16, 0
    %p130 = por %p128, %p129
    %p131 = scmp.ne.s32.totalorder %s123, %s125
    %p132 = scmp.eq.s32.totalorder %s21, 1
    %p133 = por %p131, %p132
    %p134 = scmp.ne.s32.totalorder %s125, %s126
    %p135 = scmp.eq.s32.totalorder %s21, 0
    %p136 = por %p134, %p135
    %p137 = scmp.ne.s32.totalorder %s125, %s126
    %p138 = scmp.eq.s32.totalorder %s22, 1
    %p139 = por %p137, %p138
    %p141 = scmp.ne.s32.totalorder %s126, %s140
    %p142 = scmp.eq.s32.totalorder %s22, 0
    %p143 = por %p141, %p142
    %s145 = sadd.s32 %s144, 1
    %p148 = scmp.eq.s32.totalorder %s16, 1
    %p149 = scmp.ne.s32.totalorder %s144, %s146
    %p150 = scmp.eq.s32.totalorder %s16, 0
    %p151 = por %p149, %p150
    %p152 = scmp.ne.s32.totalorder %s144, %s146
    %p153 = scmp.eq.s32.totalorder %s21, 1
    %p154 = por %p152, %p153
    %p155 = scmp.ne.s32.totalorder %s146, %s147
    %p156 = scmp.eq.s32.totalorder %s21, 0
    %p157 = por %p155, %p156
    %p158 = scmp.ne.s32.totalorder %s146, %s147
    %p159 = scmp.eq.s32.totalorder %s22, 1
    %p160 = por %p158, %p159
    %p162 = scmp.ne.s32.totalorder %s147, %s161
    %p163 = scmp.eq.s32.totalorder %s22, 0
    %p164 = por %p162, %p163
    %s166 = sadd.s32 %s165, 1
    %p169 = scmp.eq.s32.totalorder %s16, 1
    %p170 = scmp.ne.s32.totalorder %s165, %s167
    %p171 = scmp.eq.s32.totalorder %s16, 0
    %p172 = por %p170, %p171
    %p173 = scmp.ne.s32.totalorder %s165, %s167
    %p174 = scmp.eq.s32.totalorder %s21, 1
    %p175 = por %p173, %p174
    %p176 = scmp.ne.s32.totalorder %s167, %s168
    %p177 = scmp.eq.s32.totalorder %s21, 0
    %p178 = por %p176, %p177
    %p179 = scmp.ne.s32.totalorder %s167, %s168
    %p180 = scmp.eq.s32.totalorder %s22, 1
    %p181 = por %p179, %p180
    %p183 = scmp.ne.s32.totalorder %s168, %s182
    %p184 = scmp.eq.s32.totalorder %s22, 0
    %p185 = por %p183, %p184
    %s187 = sadd.s32 %s186, 1
    %p190 = scmp.eq.s32.totalorder %s16, 1
    %p191 = scmp.ne.s32.totalorder %s186, %s188
    %p192 = scmp.eq.s32.totalorder %s16, 0
    %p193 = por %p191, %p192
    %p194 = scmp.ne.s32.totalorder %s186, %s188
    %p195 = scmp.eq.s32.totalorder %s21, 1
    %p196 = por %p194, %p195
    %p197 = scmp.ne.s32.totalorder %s188, %s189
    %p198 = scmp.eq.s32.totalorder %s21, 0
    %p199 = por %p197, %p198
    %p200 = scmp.ne.s32.totalorder %s188, %s189
    %p201 = scmp.eq.s32.totalorder %s22, 1
    %p202 = por %p200, %p201
    %p204 = scmp.ne.s32.totalorder %s189, %s203
    %p205 = scmp.eq.s32.totalorder %s22, 0
    %p206 = por %p204, %p205
    %s207 = ssub.s32 %s16, %s23
    %p208 = scmp.eq.s32.totalorder %s207, 0
    %s210 = sadd.s32 %s209, 1
    %s211 = scalar_select %p208, %s209, %s210
    %p214 = pneg %p208
    %p215 = scmp.eq.s32.totalorder %s16, 1
    %p216 = por %p214, %p215
    %p217 = scmp.ne.s32.totalorder %s209, %s212
    %p218 = scmp.eq.s32.totalorder %s16, 0
    %p219 = por %p217, %p218
    %p220 = scmp.ne.s32.totalorder %s209, %s212
    %p221 = scmp.eq.s32.totalorder %s21, 1
    %p222 = por %p220, %p221
    %p223 = scmp.ne.s32.totalorder %s212, %s213
    %p224 = scmp.eq.s32.totalorder %s21, 0
    %p225 = por %p223, %p224
    %p226 = scmp.ne.s32.totalorder %s212, %s213
    %p227 = scmp.eq.s32.totalorder %s22, 1
    %p228 = por %p226, %p227
    %p230 = scmp.ne.s32.totalorder %s213, %s229
    %p231 = scmp.eq.s32.totalorder %s22, 0
    %p232 = por %p230, %p231
    %s233 = ssub.s32 %s16, %s23
    %p234 = scmp.eq.s32.totalorder %s233, 0
    %s236 = sadd.s32 %s235, 1
    %s237 = scalar_select %p234, %s235, %s236
    %p240 = pneg %p234
    %p241 = scmp.eq.s32.totalorder %s16, 1
    %p242 = por %p240, %p241
    %p243 = scmp.ne.s32.totalorder %s235, %s238
    %p244 = scmp.eq.s32.totalorder %s16, 0
    %p245 = por %p243, %p244
    %p246 = scmp.ne.s32.totalorder %s235, %s238
    %p247 = scmp.eq.s32.totalorder %s21, 1
    %p248 = por %p246, %p247
    %p249 = scmp.ne.s32.totalorder %s238, %s239
    %p250 = scmp.eq.s32.totalorder %s21, 0
    %p251 = por %p249, %p250
    %p252 = scmp.ne.s32.totalorder %s238, %s239
    %p253 = scmp.eq.s32.totalorder %s22, 1
    %p254 = por %p252, %p253
    %p256 = scmp.ne.s32.totalorder %s239, %s255
    %p257 = scmp.eq.s32.totalorder %s22, 0
    %p258 = por %p256, %p257
    %p259 = scmp.le.s32.totalorder 1, %s16
    %p260 = scmp.lt.s32.totalorder %s16, 3
    %p261 = pnand %p259, %p260
    %p262 = pneg %p261
    // Predicated region
    $region9: #{conv2d_res_block.4} parent=5 // pred_check
      _
    $region10: #{conv2d_res_block.4} parent=5 // pred_check_branch
      %264 = sbr.rel (%p261) target = $region12
    $region11: #{conv2d_res_block.4} parent=5 // pred_region
      %s265 = ssub.s32 %s16, 1
      // Predicated region
      $region13: #{conv2d_res_block.4} parent=11 // pred_check
        %p266 = pneg %p115
      $region14: #{conv2d_res_block.4} parent=11 // pred_check_branch
        %268 = sbr.rel (%p266) target = $region16
      $region15: #{conv2d_res_block.4} parent=11 // pred_region
        _
      $region16: #{conv2d_res_block.4} parent=11 // pred_fallthru
        _
      // Predicated region
      $region17: #{conv2d_res_block.4} parent=11 // pred_check
        %p269 = pneg %p136
      $region18: #{conv2d_res_block.4} parent=11 // pred_check_branch
        %271 = sbr.rel (%p269) target = $region20
      $region19: #{conv2d_res_block.4} parent=11 // pred_region
        _
      $region20: #{conv2d_res_block.4} parent=11 // pred_fallthru
        _
      // Predicated region
      $region21: #{conv2d_res_block.4} parent=11 // pred_check
        %p272 = pneg %p157
      $region22: #{conv2d_res_block.4} parent=11 // pred_check_branch
        %274 = sbr.rel (%p272) target = $region24
      $region23: #{conv2d_res_block.4} parent=11 // pred_region
        _
      $region24: #{conv2d_res_block.4} parent=11 // pred_fallthru
        _
      // Predicated region
      $region25: #{conv2d_res_block.4} parent=11 // pred_check
        %p275 = pneg %p178
      $region26: #{conv2d_res_block.4} parent=11 // pred_check_branch
        %277 = sbr.rel (%p275) target = $region28
      $region27: #{conv2d_res_block.4} parent=11 // pred_region
        _
      $region28: #{conv2d_res_block.4} parent=11 // pred_fallthru
        _
      // Predicated region
      $region29: #{conv2d_res_block.4} parent=11 // pred_check
        %p278 = pneg %p199
      $region30: #{conv2d_res_block.4} parent=11 // pred_check_branch
        %280 = sbr.rel (%p278) target = $region32
      $region31: #{conv2d_res_block.4} parent=11 // pred_region
        _
      $region32: #{conv2d_res_block.4} parent=11 // pred_fallthru
        _
    $region12: #{conv2d_res_block.4} parent=5 // pred_fallthru
      _
    %p281 = scmp.lt.s32.totalorder %s16, 2
    // Predicated region
    $region33: #{conv2d_res_block.4} parent=5 // pred_check
      %p282 = pneg %p281
    $region34: #{conv2d_res_block.4} parent=5 // pred_check_branch
      %284 = sbr.rel (%p282) target = $region36
    $region35: #{conv2d_res_block.4} parent=5 // pred_region
      // Predicated region
      $region37: #{conv2d_res_block.4} parent=35 // pred_check
        %p285 = pneg %p36
      $region38: #{conv2d_res_block.4} parent=35 // pred_check_branch
        %287 = sbr.rel (%p285) target = $region40
      $region39: #{conv2d_res_block.4} parent=35 // pred_region
        %p288 = scmp.lt.s32.totalorder %s16, 1
        %s289 = scalar_select %p288, %s16, 1
        %s290 = smul.addr %s289, 3
        %s291 = smul.addr %s290, 4
        %s292 = scalar_lea.vmem %s0, %s291
      $region40: #{conv2d_res_block.4} parent=35 // pred_fallthru
        _
      // Predicated region
      $region41: #{conv2d_res_block.4} parent=35 // pred_check
        %p293 = pneg %p62
      $region42: #{conv2d_res_block.4} parent=35 // pred_check_branch
        %295 = sbr.rel (%p293) target = $region44
      $region43: #{conv2d_res_block.4} parent=35 // pred_region
        %p296 = scmp.lt.s32.totalorder %s16, 1
        %s297 = scalar_select %p296, %s16, 1
        %s298 = smul.addr %s297, 3
        %s299 = smul.addr %s298, 4
        %s300 = scalar_lea.vmem %s1, %s299
      $region44: #{conv2d_res_block.4} parent=35 // pred_fallthru
        _
      // Predicated region
      $region45: #{conv2d_res_block.4} parent=35 // pred_check
        %p301 = pneg %p88
      $region46: #{conv2d_res_block.4} parent=35 // pred_check_branch
        %303 = sbr.rel (%p301) target = $region48
      $region47: #{conv2d_res_block.4} parent=35 // pred_region
        %p304 = scmp.lt.s32.totalorder %s16, 1
        %s305 = scalar_select %p304, %s16, 1
        %s306 = smul.addr %s305, 3
        %s307 = smul.addr %s306, 8
        %s308 = scalar_lea.vmem %s2, %s307
      $region48: #{conv2d_res_block.4} parent=35 // pred_fallthru
        _
    $region36: #{conv2d_res_block.4} parent=5 // pred_fallthru
      _
    %p309 = scmp.le.s32.totalorder 1, %s16
    %p310 = scmp.lt.s32.totalorder %s16, 3
    %p311 = pnand %p309, %p310
    %p312 = pneg %p311
    // Predicated region
    $region49: #{conv2d_res_block.4} parent=5 // pred_check
      _
    $region50: #{conv2d_res_block.4} parent=5 // pred_check_branch
      %314 = sbr.rel (%p311) target = $region52
    $region51: #{conv2d_res_block.4} parent=5 // pred_region
      %s315 = ssub.s32 %s16, 1
      %p316 = scmp.lt.s32.totalorder %s21, 1
      %s317 = scalar_select %p316, %s21, 1
      %s318 = smul.addr %s317, 3
      %s319 = smul.addr %s318, 4
      %s320 = scalar_lea.vmem %s0, %s319
      %p321 = pneg %p42
      %p322 = pneg %p39
      %p323 = scmp.lt.s32.totalorder %s21, 1
      %s324 = scalar_select %p323, %s21, 1
      %s325 = smul.addr %s324, 3
      %s326 = smul.addr %s325, 4
      %s327 = scalar_lea.vmem %s1, %s326
      %p328 = pneg %p68
      %p329 = pneg %p65
      %p330 = scmp.lt.s32.totalorder %s21, 1
      %s331 = scalar_select %p330, %s21, 1
      %s332 = smul.addr %s331, 3
      %s333 = smul.addr %s332, 8
      %s334 = scalar_lea.vmem %s2, %s333
      %p335 = pneg %p94
      %p336 = pneg %p91
      %p337 = pneg %p115
      %p338 = pneg %p112
      %p339 = pneg %p136
      %p340 = pneg %p133
      %p341 = pneg %p157
      %p342 = pneg %p154
      %p343 = pneg %p178
      %p344 = pneg %p175
      %p345 = pneg %p199
      %p346 = pneg %p196
      %p347 = pneg %p225
      %p348 = pneg %p222
      %p349 = scmp.lt.s32.totalorder %s21, 1
      %s350 = scalar_select %p349, %s21, 1
      %s351 = smul.addr %s350, 3
      %s352 = smul.addr %s351, 4
      %s353 = scalar_lea.vmem %s8, %s352
      %p354 = pneg %p251
      %p355 = pneg %p248
      %p356 = scmp.lt.s32.totalorder %s21, 1
      %s357 = scalar_select %p356, %s21, 1
      %s358 = smul.addr %s357, 2
      %s359 = scalar_lea.vmem %s9, %s358
      %p360 = scmp.lt.s32.totalorder %s21, 1
      %s361 = scalar_select %p360, %s21, 1
      %s362 = smul.addr %s361, 3
      %s363 = smul.addr %s362, 4
      %s364 = scalar_lea.vmem %s0, %s363
      %p365 = scmp.lt.s32.totalorder %s21, 1
      %s366 = scalar_select %p365, %s21, 1
      %s367 = smul.addr %s366, 3
      %s368 = smul.addr %s367, 4
      %s369 = scalar_lea.vmem %s1, %s368
      %p370 = scmp.lt.s32.totalorder %s21, 1
      %s371 = scalar_select %p370, %s21, 1
      %s372 = smul.addr %s371, 3
      %s373 = smul.addr %s372, 8
      %s374 = scalar_lea.vmem %s2, %s373
      %p375 = scmp.lt.s32.totalorder %s21, 1
      %s376 = scalar_select %p375, %s21, 1
      %s377 = smul.addr %s376, 3
      %s378 = smul.addr %s377, 4
      %s379 = scalar_lea.vmem %s8, %s378
      %p380 = scmp.lt.s32.totalorder %s21, 1
      %s381 = scalar_select %p380, %s21, 1
      %s382 = smul.addr %s381, 2
      %s383 = scalar_lea.vmem %s9, %s382
      %v385 = vld [vmem:[%s374] sm:$0xff]
      %v386 = vld [vmem:[%s374 + $0x8] sm:$0xff]
      %v387 = vld [vmem:[%s374 + $0x10] sm:$0x3]
      %v388 = vld [vmem:[%s364] sm:$0xf]
      %v389 = vld [vmem:[%s364 + $0x4] sm:$0xf]
      %v390 = vld [vmem:[%s364 + $0x8] sm:$0x1]
      %v391 = vunpack.c.l.bf16 %v388
      %v392 = vunpack.c.l.bf16 %v389
      %v393 = vunpack.c.l.bf16 %v390
      %v394 = vld [vmem:[%s3] sm:$0x1]
      %v396 = vlaneseq
      %v397 = vshrl.u32 %v396, 7
      %v398 = vsub.s32 0, %v397
      %v399 = vrot.slane %v394, %v398
      %v401 = vmul.f32 %v391, %v399
      %v402 = vmul.f32 %v392, %v399
      %v403 = vmul.f32 %v393, %v399
      %v404 = vld [vmem:[%s4] sm:$0x1]
      %v406 = vlaneseq
      %v407 = vshrl.u32 %v406, 7
      %v408 = vsub.s32 0, %v407
      %v409 = vrot.slane %v404, %v408
      %v411 = vadd.f32 %v401, %v409
      %v412 = vadd.f32 %v402, %v409
      %v413 = vadd.f32 %v403, %v409
      %v414 = vmul.f32 %v411, 0.5
      %v415 = vmul.f32 %v412, 0.5
      %v416 = vmul.f32 %v413, 0.5
      %v417 = vmul.f32 %v411, 0.70710677
      %v418 = vmul.f32 %v412, 0.70710677
      %v419 = vmul.f32 %v413, 0.70710677
      %vm420 = vcmp.lt.f32.partialorder %v417, 0.0
      %vm421 = vcmp.lt.f32.partialorder %v418, 0.0
      %vm422 = vcmp.lt.f32.partialorder %v419, 0.0
      %v423 = vsel %vm420, -1.0, 1.0
      %v424 = vsel %vm421, -1.0, 1.0
      %v425 = vsel %vm422, -1.0, 1.0
      %v426 = vand.u32 2147483647, %v417
      %v427 = vand.u32 2147483647, %v418
      %v428 = vand.u32 2147483647, %v419
      %v429 = vmul.f32 %v426, 0.3275911
      %v430 = vmul.f32 %v427, 0.3275911
      %v431 = vmul.f32 %v428, 0.3275911
      %v432 = vadd.f32 %v429, 1.0
      %v433 = vadd.f32 %v430, 1.0
      %v434 = vadd.f32 %v431, 1.0
      %v435 = vrcp.pop %v432
      %v436 = vmul.f32 1.0, %v435
      %v437 = vrcp.pop %v433
      %v438 = vmul.f32 1.0, %v437
      %v439 = vrcp.pop %v434
      %v440 = vmul.f32 1.0, %v439
      %v441 = vmul.f32 %v436, 1.0614054
      %v442 = vmul.f32 %v438, 1.0614054
      %v443 = vmul.f32 %v440, 1.0614054
      %v444 = vadd.f32 %v441, -1.4531521
      %v445 = vadd.f32 %v442, -1.4531521
      %v446 = vadd.f32 %v443, -1.4531521
      %v447 = vmul.f32 %v444, %v436
      %v448 = vmul.f32 %v445, %v438
      %v449 = vmul.f32 %v446, %v440
      %v450 = vadd.f32 %v447, 1.4214138
      %v451 = vadd.f32 %v448, 1.4214138
      %v452 = vadd.f32 %v449, 1.4214138
      %v453 = vmul.f32 %v450, %v436
      %v454 = vmul.f32 %v451, %v438
      %v455 = vmul.f32 %v452, %v440
      %v456 = vadd.f32 %v453, -0.28449672
      %v457 = vadd.f32 %v454, -0.28449672
      %v458 = vadd.f32 %v455, -0.28449672
      %v459 = vmul.f32 %v456, %v436
      %v460 = vmul.f32 %v457, %v438
      %v461 = vmul.f32 %v458, %v440
      %v462 = vadd.f32 %v459, 0.2548296
      %v463 = vadd.f32 %v460, 0.2548296
      %v464 = vadd.f32 %v461, 0.2548296
      %v465 = vmul.f32 %v462, %v436
      %v466 = vmul.f32 %v463, %v438
      %v467 = vmul.f32 %v464, %v440
      %v468 = vsub.f32 0.0, %v426
      %v469 = vsub.f32 0.0, %v427
      %v470 = vsub.f32 0.0, %v428
      %v471 = vmul.f32 %v468, %v426
      %v472 = vmul.f32 %v469, %v427
      %v473 = vmul.f32 %v470, %v428
      %v474 = vmul.f32 %v471, 1.442695
      %v475 = vpow.pop %v474
      %v476 = vmul.f32 %v472, 1.442695
      %v477 = vpow.pop %v476
      %v478 = vmul.f32 %v473, 1.442695
      %v479 = vpow.pop %v478
      %v480 = vmul.f32 %v465, %v475
      %v481 = vmul.f32 %v466, %v477
      %v482 = vmul.f32 %v467, %v479
      %v483 = vsub.f32 1.0, %v480
      %v484 = vsub.f32 1.0, %v481
      %v485 = vsub.f32 1.0, %v482
      %v486 = vmul.f32 %v423, %v483
      %v487 = vmul.f32 %v424, %v484
      %v488 = vmul.f32 %v425, %v485
      %v489 = vadd.f32 %v486, 1.0
      %v490 = vadd.f32 %v487, 1.0
      %v491 = vadd.f32 %v488, 1.0
      %v492 = vmul.f32 %v414, %v489
      %v493 = vmul.f32 %v415, %v490
      %v494 = vmul.f32 %v416, %v491
      %496 = vset.pattern.permute.xlu0 0
      %497 = vperm.xlu0 %496, %v385
      %v498 = vpop.permute.xlu0 %497
      %501 = vset.pattern.permute.xlu0 0
      %502 = vperm.xlu0 %501, %v386
      %v503 = vpop.permute.xlu0 %502
      %506 = vset.pattern.permute.xlu0 0
      %507 = vperm.xlu0 %506, %v387
      %v508 = vpop.permute.xlu0 %507
      %v510 = vmul.f32 %v492, %v498
      %v511 = vmul.f32 %v493, %v503
      %v512 = vmul.f32 %v494, %v508
      %v513 = vpack.c.bf16 %v511, %v510
      %v514 = vpack.c.bf16 %v512, %v512
      %515 = vst [vmem:[#allocation2 + $0x7] sm:$0x1] 0.0
      %516 = vst [vmem:[#allocation2 + $0x1a] sm:$0x1] 0.0
      %517 = vst [vmem:[#allocation2 + $0x8] sm:$0xff] %v510
      %518 = vst [vmem:[#allocation2 + $0x10] sm:$0xff] %v511
      %519 = vst [vmem:[#allocation2 + $0x18] sm:$0x3] %v512
      %v520 = vld [vmem:[%s369] sm:$0xf]
      %v521 = vld [vmem:[%s369 + $0x4] sm:$0xf]
      %v522 = vld [vmem:[%s369 + $0x8] sm:$0x3]
      %v526 = vunpack.c.l.b16 %v520
      %v527 = vunpack.c.l.b16 %v521
      %v528 = vunpack.c.l.b16 %v522
      %v529 = vpack.c.b16 %v527, %v526
      %v530 = vpack.c.b16 %v528, %v528
      %vm531 = vsmask.f32 7424
      %v533 = vshrl.u32 %v529, 16
      %v535 = vshll.u32 %v529, 16
      %v537 = vrot.slane %v535, 1
      %v538 = vor.u32 %v533, %v537
      %v540 = vshll.u32 %v530, 16
      %v542 = vrot.slane %v540, 1
      %v543 = vsel %vm531, %v538, %v542
      %v544 = vshrl.u32 %v530, 16
      %v546 = vor.u32 %v544, %v542
      %v549 = vld [vmem:[%s6] sm:$0xf]
      %v550 = vld [vmem:[%s6 + $0x4] sm:$0xf]
      %v551 = vld [vmem:[%s6 + $0x8] sm:$0xf]
      %v552 = vld [vmem:[%s6 + $0xc] sm:$0xf]
      %v553 = vld [vmem:[%s6 + $0x10] sm:$0xf]
      %v554 = vld [vmem:[%s6 + $0x14] sm:$0xf]
      %v555 = vld [vmem:[%s6 + $0x18] sm:$0xf]
      %v556 = vld [vmem:[%s6 + $0x1c] sm:$0xf]
      %v557 = vld [vmem:[%s6 + $0x20] sm:$0xf]
      %v558 = vld [vmem:[%s6 + $0x24] sm:$0xf]
      %v559 = vld [vmem:[%s6 + $0x28] sm:$0xf]
      %v560 = vld [vmem:[%s6 + $0x2c] sm:$0xf]
      %v561 = vld [vmem:[%s6 + $0x30] sm:$0xf]
      %v562 = vld [vmem:[%s6 + $0x34] sm:$0xf]
      %v563 = vld [vmem:[%s6 + $0x38] sm:$0xf]
      %v564 = vld [vmem:[%s6 + $0x3c] sm:$0xf]
      %v565 = vld [vmem:[%s6 + $0x40] sm:$0xf]
      %v566 = vld [vmem:[%s6 + $0x44] sm:$0xf]
      %v567 = vld [vmem:[%s6 + $0x48] sm:$0xf]
      %v568 = vld [vmem:[%s6 + $0x4c] sm:$0xf]
      %v569 = vld [vmem:[%s6 + $0x50] sm:$0xf]
      %v570 = vld [vmem:[%s6 + $0x54] sm:$0xf]
      %v571 = vld [vmem:[%s6 + $0x58] sm:$0xf]
      %v572 = vld [vmem:[%s6 + $0x5c] sm:$0xf]
      %v573 = vld [vmem:[%s6 + $0x60] sm:$0xf]
      %v574 = vld [vmem:[%s6 + $0x64] sm:$0xf]
      %v575 = vld [vmem:[%s6 + $0x68] sm:$0xf]
      %v576 = vld [vmem:[%s6 + $0x6c] sm:$0xf]
      %v577 = vld [vmem:[%s6 + $0x70] sm:$0xf]
      %v578 = vld [vmem:[%s6 + $0x74] sm:$0xf]
      %v579 = vld [vmem:[%s6 + $0x78] sm:$0xf]
      %v580 = vld [vmem:[%s6 + $0x7c] sm:$0xf]
      %v581 = vld [vmem:[#allocation2 + $0x7] sm:$0xff]
      %v582 = vld [vmem:[#allocation2 + $0xf] sm:$0xff]
      %v583 = vld [vmem:[#allocation2 + $0x17] sm:$0x3]
      %v584 = vpack.c.bf16 %v582, %v581
      %v585 = vpack.c.bf16 %v583, %v583
      %v586 = vld [vmem:[%s5] sm:$0xf]
      %v587 = vld [vmem:[%s5 + $0x4] sm:$0xf]
      %v588 = vld [vmem:[%s5 + $0x8] sm:$0xf]
      %v589 = vld [vmem:[%s5 + $0xc] sm:$0xf]
      %v590 = vld [vmem:[%s5 + $0x10] sm:$0xf]
      %v591 = vld [vmem:[%s5 + $0x14] sm:$0xf]
      %v592 = vld [vmem:[%s5 + $0x18] sm:$0xf]
      %v593 = vld [vmem:[%s5 + $0x1c] sm:$0xf]
      %v594 = vld [vmem:[%s5 + $0x20] sm:$0xf]
      %v595 = vld [vmem:[%s5 + $0x24] sm:$0xf]
      %v596 = vld [vmem:[%s5 + $0x28] sm:$0xf]
      %v597 = vld [vmem:[%s5 + $0x2c] sm:$0xf]
      %v598 = vld [vmem:[%s5 + $0x30] sm:$0xf]
      %v599 = vld [vmem:[%s5 + $0x34] sm:$0xf]
      %v600 = vld [vmem:[%s5 + $0x38] sm:$0xf]
      %v601 = vld [vmem:[%s5 + $0x3c] sm:$0xf]
      %v618 = vunpack.c.l.b16 %v586
      %v619 = vunpack.c.l.b16 %v587
      %v620 = vunpack.c.l.b16 %v588
      %v621 = vunpack.c.l.b16 %v589
      %v622 = vunpack.c.l.b16 %v590
      %v623 = vunpack.c.l.b16 %v591
      %v624 = vunpack.c.l.b16 %v592
      %v625 = vunpack.c.l.b16 %v593
      %v626 = vunpack.c.l.b16 %v594
      %v627 = vunpack.c.l.b16 %v595
      %v628 = vunpack.c.l.b16 %v596
      %v629 = vunpack.c.l.b16 %v597
      %v630 = vunpack.c.l.b16 %v598
      %v631 = vunpack.c.l.b16 %v599
      %v632 = vunpack.c.l.b16 %v600
      %v633 = vunpack.c.l.b16 %v601
      %v634 = vpack.c.b16 %v619, %v618
      %v635 = vpack.c.b16 %v621, %v620
      %v636 = vpack.c.b16 %v623, %v622
      %v637 = vpack.c.b16 %v625, %v624
      %v638 = vpack.c.b16 %v627, %v626
      %v639 = vpack.c.b16 %v629, %v628
      %v640 = vpack.c.b16 %v631, %v630
      %v641 = vpack.c.b16 %v633, %v632
      %650 = vmatprep.subr.bf16.mxu0 0
      %651 = vmatpush1.bf16.msra.mxu0 %v634
      %652 = vmatprep.subr.bf16.mxu0 0
      %653 = vmatpush1.bf16.msra.mxu0 %v635
      %654 = vmatprep.subr.bf16.mxu0 0
      %655 = vmatpush1.bf16.msra.mxu0 %v636
      %656 = vmatprep.subr.bf16.mxu0 0
      %657 = vmatpush1.bf16.msra.mxu0 %v637
      %658 = vmatprep.subr.bf16.mxu0 0
      %659 = vmatpush1.bf16.msra.mxu0 %v638
      %660 = vmatprep.subr.bf16.mxu0 0
      %661 = vmatpush1.bf16.msra.mxu0 %v639
      %662 = vmatprep.subr.bf16.mxu0 0
      %663 = vmatpush1.bf16.msra.mxu0 %v640
      %664 = vmatprep.subr.bf16.mxu0 0
      %665 = vmatpush1.bf16.msra.mxu0 %v641
      %666 = vmatprep.subr.bf16.mxu0 0
      %667 = vmatpush1.bf16.msra.mxu0 0
      %668 = vmatprep.subr.bf16.mxu0 0
      %669 = vmatpush1.bf16.msra.mxu0 0
      %670 = vmatprep.subr.bf16.mxu0 0
      %671 = vmatpush1.bf16.msra.mxu0 0
      %672 = vmatprep.subr.bf16.mxu0 0
      %673 = vmatpush1.bf16.msra.mxu0 0
      %674 = vmatprep.subr.bf16.mxu0 0
      %675 = vmatpush1.bf16.msra.mxu0 0
      %676 = vmatprep.subr.bf16.mxu0 0
      %677 = vmatpush1.bf16.msra.mxu0 0
      %678 = vmatprep.subr.bf16.mxu0 0
      %679 = vmatpush1.bf16.msra.mxu0 0
      %680 = vmatprep.subr.bf16.mxu0 0
      %681 = vmatpush1.bf16.msra.mxu0 0
      %682 = vmatprep.mubr.bf16.mxu0 0
      %683 = vmatmul.mubr.bf16.gmra.mrb[0].mxu0 %v584
      %v684 = vpop.f32.mrb[0].mxu0
      %v685 = vadd.f32 0.0, %v684
      %v686 = vpop.f32.mrb[0].mxu0
      %v687 = vpop.f32.mrb[0].mxu0
      %v688 = vadd.f32 0.0, %v687
      %v689 = vpop.f32.mrb[0].mxu0
      %690 = vmatprep.mubr.bf16.mxu0 0
      %691 = vmatmul.mubr.bf16.gmra.mrb[0].mxu0 %v585
      %v692 = vpop.f32.mrb[0].mxu0
      %v693 = vadd.f32 0.0, %v692
      %v694 = vpop.f32.mrb[0].mxu0
      %v695 = vpop.f32.mrb[0].mxu0
      %v696 = vpop.f32.mrb[0].mxu0
      %697 = vdwg.mxu0
      %v730 = vunpack.c.l.b16 %v549
      %v731 = vunpack.c.l.b16 %v550
      %v732 = vunpack.c.l.b16 %v551
      %v733 = vunpack.c.l.b16 %v552
      %v734 = vunpack.c.l.b16 %v553
      %v735 = vunpack.c.l.b16 %v554
      %v736 = vunpack.c.l.b16 %v555
      %v737 = vunpack.c.l.b16 %v556
      %v738 = vunpack.c.l.b16 %v557
      %v739 = vunpack.c.l.b16 %v558
      %v740 = vunpack.c.l.b16 %v559
      %v741 = vunpack.c.l.b16 %v560
      %v742 = vunpack.c.l.b16 %v561
      %v743 = vunpack.c.l.b16 %v562
      %v744 = vunpack.c.l.b16 %v563
      %v745 = vunpack.c.l.b16 %v564
      %v746 = vunpack.c.l.b16 %v565
      %v747 = vunpack.c.l.b16 %v566
      %v748 = vunpack.c.l.b16 %v567
      %v749 = vunpack.c.l.b16 %v568
      %v750 = vunpack.c.l.b16 %v569
      %v751 = vunpack.c.l.b16 %v570
      %v752 = vunpack.c.l.b16 %v571
      %v753 = vunpack.c.l.b16 %v572
      %v754 = vunpack.c.l.b16 %v573
      %v755 = vunpack.c.l.b16 %v574
      %v756 = vunpack.c.l.b16 %v575
      %v757 = vunpack.c.l.b16 %v576
      %v758 = vunpack.c.l.b16 %v577
      %v759 = vunpack.c.l.b16 %v578
      %v760 = vunpack.c.l.b16 %v579
      %v761 = vunpack.c.l.b16 %v580
      %v762 = vpack.c.b16 %v731, %v730
      %v763 = vpack.c.b16 %v733, %v732
      %v764 = vpack.c.b16 %v735, %v734
      %v765 = vpack.c.b16 %v737, %v736
      %v766 = vpack.c.b16 %v739, %v738
      %v767 = vpack.c.b16 %v741, %v740
      %v768 = vpack.c.b16 %v743, %v742
      %v769 = vpack.c.b16 %v745, %v744
      %v770 = vpack.c.b16 %v747, %v746
      %v771 = vpack.c.b16 %v749, %v748
      %v772 = vpack.c.b16 %v751, %v750
      %v773 = vpack.c.b16 %v753, %v752
      %v774 = vpack.c.b16 %v755, %v754
      %v775 = vpack.c.b16 %v757, %v756
      %v776 = vpack.c.b16 %v759, %v758
      %v777 = vpack.c.b16 %v761, %v760
      %794 = vmatprep.subr.bf16.mxu0 0
      %795 = vmatpush1.bf16.msra.mxu0 %v762
      %796 = vmatprep.subr.bf16.mxu0 0
      %797 = vmatpush1.bf16.msra.mxu0 %v763
      %798 = vmatprep.subr.bf16.mxu0 0
      %799 = vmatpush1.bf16.msra.mxu0 %v764
      %800 = vmatprep.subr.bf16.mxu0 0
      %801 = vmatpush1.bf16.msra.mxu0 %v765
      %802 = vmatprep.subr.bf16.mxu0 0
      %803 = vmatpush1.bf16.msra.mxu0 %v766
      %804 = vmatprep.subr.bf16.mxu0 0
      %805 = vmatpush1.bf16.msra.mxu0 %v767
      %806 = vmatprep.subr.bf16.mxu0 0
      %807 = vmatpush1.bf16.msra.mxu0 %v768
      %808 = vmatprep.subr.bf16.mxu0 0
      %809 = vmatpush1.bf16.msra.mxu0 %v769
      %810 = vmatprep.subr.bf16.mxu0 0
      %811 = vmatpush1.bf16.msra.mxu0 %v770
      %812 = vmatprep.subr.bf16.mxu0 0
      %813 = vmatpush1.bf16.msra.mxu0 %v771
      %814 = vmatprep.subr.bf16.mxu0 0
      %815 = vmatpush1.bf16.msra.mxu0 %v772
      %816 = vmatprep.subr.bf16.mxu0 0
      %817 = vmatpush1.bf16.msra.mxu0 %v773
      %818 = vmatprep.subr.bf16.mxu0 0
      %819 = vmatpush1.bf16.msra.mxu0 %v774
      %820 = vmatprep.subr.bf16.mxu0 0
      %821 = vmatpush1.bf16.msra.mxu0 %v775
      %822 = vmatprep.subr.bf16.mxu0 0
      %823 = vmatpush1.bf16.msra.mxu0 %v776
      %824 = vmatprep.subr.bf16.mxu0 0
      %825 = vmatpush1.bf16.msra.mxu0 %v777
      %826 = vmatprep.mubr.bf16.mxu0 %v543
      %827 = vmatmul.mubr.bf16.gmra.mrb[0].mxu0 %v513
      %v828 = vpop.f32.mrb[0].mxu0
      %v829 = vadd.f32 %v685, %v828
      %v830 = vpop.f32.mrb[0].mxu0
      %v831 = vpop.f32.mrb[0].mxu0
      %v832 = vadd.f32 %v688, %v831
      %v833 = vpop.f32.mrb[0].mxu0
      %834 = vmatprep.mubr.bf16.mxu0 %v546
      %835 = vmatmul.mubr.bf16.gmra.mrb[0].mxu0 %v514
      %v836 = vpop.f32.mrb[0].mxu0
      %v837 = vadd.f32 %v693, %v836
      %v838 = vpop.f32.mrb[0].mxu0
      %v839 = vpop.f32.mrb[0].mxu0
      %v840 = vpop.f32.mrb[0].mxu0
      %841 = vdwg.mxu0
      %v842 = vld [vmem:[#allocation2 + $0x9] sm:$0xff]
      %v843 = vld [vmem:[#allocation2 + $0x11] sm:$0xff]
      %v844 = vld [vmem:[#allocation2 + $0x19] sm:$0x3]
      %v845 = vpack.c.bf16 %v843, %v842
      %v846 = vpack.c.bf16 %v844, %v844
      %s847 = scalar_lea.vmem %s5, 64
      %v848 = vld [vmem:[%s847] sm:$0xf]
      %v849 = vld [vmem:[%s847 + $0x4] sm:$0xf]
      %v850 = vld [vmem:[%s847 + $0x8] sm:$0xf]
      %v851 = vld [vmem:[%s847 + $0xc] sm:$0xf]
      %v852 = vld [vmem:[%s847 + $0x10] sm:$0xf]
      %v853 = vld [vmem:[%s847 + $0x14] sm:$0xf]
      %v854 = vld [vmem:[%s847 + $0x18] sm:$0xf]
      %v855 = vld [vmem:[%s847 + $0x1c] sm:$0xf]
      %v856 = vld [vmem:[%s847 + $0x20] sm:$0xf]
      %v857 = vld [vmem:[%s847 + $0x24] sm:$0xf]
      %v858 = vld [vmem:[%s847 + $0x28] sm:$0xf]
      %v859 = vld [vmem:[%s847 + $0x2c] sm:$0xf]
      %v860 = vld [vmem:[%s847 + $0x30] sm:$0xf]
      %v861 = vld [vmem:[%s847 + $0x34] sm:$0xf]
      %v862 = vld [vmem:[%s847 + $0x38] sm:$0xf]
      %v863 = vld [vmem:[%s847 + $0x3c] sm:$0xf]
      %v880 = vunpack.c.l.b16 %v848
      %v881 = vunpack.c.l.b16 %v849
      %v882 = vunpack.c.l.b16 %v850
      %v883 = vunpack.c.l.b16 %v851
      %v884 = vunpack.c.l.b16 %v852
      %v885 = vunpack.c.l.b16 %v853
      %v886 = vunpack.c.l.b16 %v854
      %v887 = vunpack.c.l.b16 %v855
      %v888 = vunpack.c.l.b16 %v856
      %v889 = vunpack.c.l.b16 %v857
      %v890 = vunpack.c.l.b16 %v858
      %v891 = vunpack.c.l.b16 %v859
      %v892 = vunpack.c.l.b16 %v860
      %v893 = vunpack.c.l.b16 %v861
      %v894 = vunpack.c.l.b16 %v862
      %v895 = vunpack.c.l.b16 %v863
      %v896 = vpack.c.b16 %v881, %v880
      %v897 = vpack.c.b16 %v883, %v882
      %v898 = vpack.c.b16 %v885, %v884
      %v899 = vpack.c.b16 %v887, %v886
      %v900 = vpack.c.b16 %v889, %v888
      %v901 = vpack.c.b16 %v891, %v890
      %v902 = vpack.c.b16 %v893, %v892
      %v903 = vpack.c.b16 %v895, %v894
      %912 = vmatprep.subr.bf16.mxu0 0
      %913 = vmatpush1.bf16.msra.mxu0 %v896
      %914 = vmatprep.subr.bf16.mxu0 0
      %915 = vmatpush1.bf16.msra.mxu0 %v897
      %916 = vmatprep.subr.bf16.mxu0 0
      %917 = vmatpush1.bf16.msra.mxu0 %v898
      %918 = vmatprep.subr.bf16.mxu0 0
      %919 = vmatpush1.bf16.msra.mxu0 %v899
      %920 = vmatprep.subr.bf16.mxu0 0
      %921 = vmatpush1.bf16.msra.mxu0 %v900
      %922 = vmatprep.subr.bf16.mxu0 0
      %923 = vmatpush1.bf16.msra.mxu0 %v901
      %924 = vmatprep.subr.bf16.mxu0 0
      %925 = vmatpush1.bf16.msra.mxu0 %v902
      %926 = vmatprep.subr.bf16.mxu0 0
      %927 = vmatpush1.bf16.msra.mxu0 %v903
      %928 = vmatprep.subr.bf16.mxu0 0
      %929 = vmatpush1.bf16.msra.mxu0 0
      %930 = vmatprep.subr.bf16.mxu0 0
      %931 = vmatpush1.bf16.msra.mxu0 0
      %932 = vmatprep.subr.bf16.mxu0 0
      %933 = vmatpush1.bf16.msra.mxu0 0
      %934 = vmatprep.subr.bf16.mxu0 0
      %935 = vmatpush1.bf16.msra.mxu0 0
      %936 = vmatprep.subr.bf16.mxu0 0
      %937 = vmatpush1.bf16.msra.mxu0 0
      %938 = vmatprep.subr.bf16.mxu0 0
      %939 = vmatpush1.bf16.msra.mxu0 0
      %940 = vmatprep.subr.bf16.mxu0 0
      %941 = vmatpush1.bf16.msra.mxu0 0
      %942 = vmatprep.subr.bf16.mxu0 0
      %943 = vmatpush1.bf16.msra.mxu0 0
      %944 = vmatprep.mubr.bf16.mxu0 0
      %945 = vmatmul.mubr.bf16.gmra.mrb[0].mxu0 %v845
      %v946 = vpop.f32.mrb[0].mxu0
      %v947 = vadd.f32 0.0, %v946
      %v948 = vpop.f32.mrb[0].mxu0
      %v949 = vpop.f32.mrb[0].mxu0
      %v950 = vadd.f32 0.0, %v949
      %v951 = vpop.f32.mrb[0].mxu0
      %952 = vmatprep.mubr.bf16.mxu0 0
      %953 = vmatmul.mubr.bf16.gmra.mrb[0].mxu0 %v846
      %v954 = vpop.f32.mrb[0].mxu0
      %v955 = vadd.f32 0.0, %v954
      %v956 = vpop.f32.mrb[0].mxu0
      %v957 = vpop.f32.mrb[0].mxu0
      %v958 = vpop.f32.mrb[0].mxu0
      %959 = vdwg.mxu0
      %v960 = vadd.f32 %v829, %v947
      %v961 = vadd.f32 %v832, %v950
      %v962 = vadd.f32 %v837, %v955
      %v963 = vld [vmem:[%s7] sm:$0x1]
      %v965 = vlaneseq
      %v966 = vshrl.u32 %v965, 7
      %v967 = vsub.s32 0, %v966
      %v968 = vrot.slane %v963, %v967
      %v970 = vadd.f32 %v960, %v968
      %v971 = vadd.f32 %v961, %v968
      %v972 = vadd.f32 %v962, %v968
      %v973 = vpack.c.bf16 %v971, %v970
      %v974 = vpack.c.bf16 %v972, %v972
      %v977 = vunpack.c.l.b16 %v973
      %v978 = vunpack.c.h.b16 %v973
      %v979 = vunpack.c.l.b16 %v974
      %v980 = vpack.c.b16 %v977, %v977
      %v981 = vpack.c.b16 %v978, %v978
      %v982 = vpack.c.b16 %v979, %v979
      %986 = vst [vmem:[%s379] sm:$0xf] %v980
      %987 = vst [vmem:[%s379 + $0x4] sm:$0xf] %v981
      %988 = vst [vmem:[%s379 + $0x8] sm:$0x1] %v982
      %v989 = vmul.f32 %v970, %v498
      %v990 = vmul.f32 %v971, %v503
      %v991 = vmul.f32 %v972, %v508
      %v992 = vadd.f32 %v989, %v990
      %vm993 = vcmask 1041408
      %v994 = vsel %vm993, %v991, 0.0
      %v995 = vadd.f32 %v992, %v994
      %v996 = vrot.slane %v995, 4
      %v997 = vadd.f32 %v995, %v996
      %v998 = vrot.slane %v997, 2
      %v999 = vadd.f32 %v997, %v998
      %v1000 = vrot.slane %v999, 1
      %v1001 = vadd.f32 %v999, %v1000
      %1002 = vst [vmem:[%s383] sm:$0x1] %v1001
      %v1003 = vmul.f32 %v989, %v970
      %v1004 = vmul.f32 %v990, %v971
      %v1005 = vmul.f32 %v991, %v972
      %v1006 = vadd.f32 %v1003, %v1004
      %v1007 = vsel %vm993, %v1005, 0.0
      %v1008 = vadd.f32 %v1006, %v1007
      %v1009 = vrot.slane %v1008, 4
      %v1010 = vadd.f32 %v1008, %v1009
      %v1011 = vrot.slane %v1010, 2
      %v1012 = vadd.f32 %v1010, %v1011
      %v1013 = vrot.slane %v1012, 1
      %v1014 = vadd.f32 %v1012, %v1013
      %1015 = vst [vmem:[%s383 + $0x1] sm:$0x1] %v1014
      %p1016 = scmp.lt.s32.totalorder %s21, 1
      %s1017 = scalar_select %p1016, %s21, 1
      %s1018 = smul.addr %s1017, 3
      %s1019 = smul.addr %s1018, 4
      %s1020 = scalar_lea.vmem %s8, %s1019
      %p1021 = scmp.lt.s32.totalorder %s21, 1
      %s1022 = scalar_select %p1021, %s21, 1
      %s1023 = smul.addr %s1022, 2
      %s1024 = scalar_lea.vmem %s9, %s1023
      // Predicated region
      $region53: #{conv2d_res_block.4} parent=51 // pred_check
        %p1025 = pneg %p222
      $region54: #{conv2d_res_block.4} parent=51 // pred_check_branch
        %1027 = sbr.rel (%p1025) target = $region56
      $region55: #{conv2d_res_block.4} parent=51 // pred_region
        _
      $region56: #{conv2d_res_block.4} parent=51 // pred_fallthru
        _
      // Predicated region
      $region57: #{conv2d_res_block.4} parent=51 // pred_check
        %p1028 = pneg %p248
      $region58: #{conv2d_res_block.4} parent=51 // pred_check_branch
        %1030 = sbr.rel (%p1028) target = $region60
      $region59: #{conv2d_res_block.4} parent=51 // pred_region
        _
      $region60: #{conv2d_res_block.4} parent=51 // pred_fallthru
        _
    $region52: #{conv2d_res_block.4} parent=5 // pred_fallthru
      _
    %p1031 = scmp.le.s32.totalorder 2, %s16
    // Predicated region
    $region61: #{conv2d_res_block.4} parent=5 // pred_check
      %p1032 = pneg %p1031
    $region62: #{conv2d_res_block.4} parent=5 // pred_check_branch
      %1034 = sbr.rel (%p1032) target = $region64
    $region63: #{conv2d_res_block.4} parent=5 // pred_region
      %s1035 = ssub.s32 %s16, 2
      // Predicated region
      $region65: #{conv2d_res_block.4} parent=63 // pred_check
        %p1036 = pneg %p228
      $region66: #{conv2d_res_block.4} parent=63 // pred_check_branch
        %1038 = sbr.rel (%p1036) target = $region68
      $region67: #{conv2d_res_block.4} parent=63 // pred_region
        %p1039 = scmp.lt.s32.totalorder %s22, 1
        %s1040 = scalar_select %p1039, %s22, 1
        %s1041 = smul.addr %s1040, 3
        %s1042 = smul.addr %s1041, 4
        %s1043 = scalar_lea.vmem %s8, %s1042
      $region68: #{conv2d_res_block.4} parent=63 // pred_fallthru
        _
      // Predicated region
      $region69: #{conv2d_res_block.4} parent=63 // pred_check
        %p1044 = pneg %p254
      $region70: #{conv2d_res_block.4} parent=63 // pred_check_branch
        %1046 = sbr.rel (%p1044) target = $region72
      $region71: #{conv2d_res_block.4} parent=63 // pred_region
        %p1047 = scmp.lt.s32.totalorder %s22, 1
        %s1048 = scalar_select %p1047, %s22, 1
        %s1049 = smul.addr %s1048, 2
        %s1050 = scalar_lea.vmem %s9, %s1049
      $region72: #{conv2d_res_block.4} parent=63 // pred_fallthru
        _
    $region64: #{conv2d_res_block.4} parent=5 // pred_fallthru
      _
  $region6: #{conv2d_res_block.4} parent=0 // loop_footer
    %s20 = sadd.s32 1, %s16
  $region7: #{conv2d_res_block.4} parent=0 // loop_footer_branch
    %15 = sbr.rel target = $region3
  $region8: #{conv2d_res_block.4} parent=0 // loop_exit
    _

</llo_original>
